<compile_context>
chip_gen: v6e
topology: v6e:2x2x1
jax: 0.10.0
libtpu: 0.0.40
codegen_flags: <defaults>
</compile_context>

<pallas_src>
import functools

import jax
import jax.numpy as jnp
from jax.experimental import pallas as pl
from jax.experimental.pallas import tpu as pltpu


# ----------------------------------------------------------------------------
# helpers
# ----------------------------------------------------------------------------
def _pick_tile(total, target, quantum):
    """Largest tile <= target that divides `total` and is a multiple of `quantum`;
    falls back to the full dimension (always legal for BlockSpec)."""
    if total <= target:
        return total
    t = (target // quantum) * quantum
    while t >= quantum:
        if total % t == 0:
            return t
        t -= quantum
    return total


_VMEM_LIMIT = 32 * 1024 * 1024  # safe on v5e/v6e/v7x; above the 16 MiB v5e scoped default


# ----------------------------------------------------------------------------
# Kernel 1: tiled dense linear  y = x @ Wt + b    (Wt is the pre-transposed (K, N) weight)
# Used for the fused QKV projection, per-projection fallback, and out_lin.
# ----------------------------------------------------------------------------
def _linear_kernel(x_ref, wt_ref, b_ref, o_ref, *, compute_dtype):
    # x_ref: (TM, K), wt_ref: (K, TN), b_ref: (1, TN), o_ref: (TM, TN)
    x = x_ref[...].astype(compute_dtype)
    wt = wt_ref[...].astype(compute_dtype)
    y = jnp.dot(x, wt, preferred_element_type=jnp.float32)   # MXU, f32 accumulate
    o_ref[...] = (y + b_ref[...]).astype(o_ref.dtype)         # bias add in f32


def pallas_linear(x2d, wt, b, *, compute_dtype=jnp.bfloat16, tm=256, tn=256):
    # x2d: (M, K), wt: (K, N), b: (N,)
    m, k = x2d.shape
    n = wt.shape[1]
    TM = _pick_tile(m, tm, 8)
    TN = _pick_tile(n, tn, 128)
    # TODO(synk): add a K-reduction grid axis (accumulator + pl.when init/finalize) if the
    #             contraction dim ever gets too large for a single (TM, K)x(K, TN) VMEM tile.
    kernel = functools.partial(_linear_kernel, compute_dtype=compute_dtype)
    return pl.pallas_call(
        kernel,
        grid=(m // TM, n // TN),
        in_specs=[
            pl.BlockSpec((TM, k), lambda i, j: (i, 0)),
            pl.BlockSpec((k, TN), lambda i, j: (0, j)),
            pl.BlockSpec((1, TN), lambda i, j: (0, j)),
        ],
        out_specs=pl.BlockSpec((TM, TN), lambda i, j: (i, j)),
        out_shape=jax.ShapeDtypeStruct((m, n), jnp.float32),
        compiler_params=pltpu.CompilerParams(
            dimension_semantics=("parallel", "parallel"),
            vmem_limit_bytes=_VMEM_LIMIT,
        ),
    )(x2d, wt, b.reshape(1, n))


# ----------------------------------------------------------------------------
# Kernel 2: attention over a (batch, q_tile) grid; all heads handled in-kernel,
# context written as one lane-dense (TQ, dim) block. Mask arrives as an additive
# bias (0 keep / finfo.min masked) matching the reference masked_fill-before-softmax.
# ----------------------------------------------------------------------------
def _attn_body(q_ref, k_ref, v_ref, bias_ref, ctx_ref, w_ref, *, n_heads, compute_dtype):
    # q_ref/ctx_ref: (1, TQ, dim); k_ref/v_ref: (1, KL, dim); bias_ref: (1, 1, KL)
    # w_ref: (1, n_heads, TQ, KL) or None
    dim = q_ref.shape[-1]
    dh = dim // n_heads
    min_val = jnp.finfo(jnp.float32).min

    q = q_ref[0].astype(compute_dtype)   # (TQ, dim)  -- scale already folded into Wq/bq
    k = k_ref[0].astype(compute_dtype)   # (KL, dim)
    v = v_ref[0].astype(compute_dtype)   # (KL, dim)
    bias = bias_ref[0]                   # (1, KL) f32, broadcasts over q rows

    ctx_parts = []
    for h in range(n_heads):             # static unroll over heads
        sl = slice(h * dh, (h + 1) * dh)
        # contract on the last dim of both operands -> no in-kernel transpose of K
        scores = jax.lax.dot_general(
            q[:, sl], k[:, sl],
            dimension_numbers=(((1,), (1,)), ((), ())),
            preferred_element_type=jnp.float32,
        )                                                      # (TQ, KL) f32
        # additive mask + clamp == masked_fill(finfo.min) semantics (overflow safe)
        scores = jnp.maximum(scores + bias, min_val)
        s_max = jnp.max(scores, axis=-1, keepdims=True)
        e = jnp.exp(scores - s_max)
        denom = jnp.sum(e, axis=-1, keepdims=True)
        weights = e * pl.reciprocal(denom, approx=True)        # EUP vrcp, f32
        ctx_parts.append(
            jnp.dot(weights.astype(compute_dtype), v[:, sl],
                    preferred_element_type=jnp.float32))       # (TQ, dh) f32
        if w_ref is not None:
            w_ref[0, h] = weights
    # single lane-dense store of the full (TQ, dim) context block
    ctx_ref[0] = jnp.concatenate(ctx_parts, axis=-1).astype(ctx_ref.dtype)
    # TODO(synk): for very long sequences (v7x 64 MiB VMEM) tile k_len with an online-softmax
    #             (flash) accumulator instead of materializing full (TQ, KL) scores per head.
    # TODO(synk): optional head_mask multiply of `weights` (rarely used) is not implemented.


def _attn_kernel_with_weights(q_ref, k_ref, v_ref, bias_ref, ctx_ref, w_ref,
                              *, n_heads, compute_dtype):
    _attn_body(q_ref, k_ref, v_ref, bias_ref, ctx_ref, w_ref,
               n_heads=n_heads, compute_dtype=compute_dtype)


def _attn_kernel_noweights(q_ref, k_ref, v_ref, bias_ref, ctx_ref,
                           *, n_heads, compute_dtype):
    _attn_body(q_ref, k_ref, v_ref, bias_ref, ctx_ref, None,
               n_heads=n_heads, compute_dtype=compute_dtype)


def pallas_attention(q, k, v, bias, n_heads, *, output_attention,
                     compute_dtype=jnp.bfloat16, tq=256):
    # q: (bs, q_len, dim); k, v: (bs, k_len, dim); bias: (bs, 1, k_len) additive f32
    bs, q_len, dim = q.shape
    k_len = k.shape[1]
    TQ = _pick_tile(q_len, tq, 8)
    grid = (bs, q_len // TQ)

    q_spec = pl.BlockSpec((1, TQ, dim), lambda b, i: (b, i, 0))
    kv_spec = pl.BlockSpec((1, k_len, dim), lambda b, i: (b, 0, 0))
    bias_spec = pl.BlockSpec((1, 1, k_len), lambda b, i: (b, 0, 0))
    ctx_spec = pl.BlockSpec((1, TQ, dim), lambda b, i: (b, i, 0))

    cp = pltpu.CompilerParams(
        dimension_semantics=("parallel", "parallel"),
        vmem_limit_bytes=_VMEM_LIMIT,
    )

    if output_attention:
        w_spec = pl.BlockSpec((1, n_heads, TQ, k_len), lambda b, i: (b, 0, i, 0))
        kernel = functools.partial(_attn_kernel_with_weights,
                                   n_heads=n_heads, compute_dtype=compute_dtype)
        ctx, weights = pl.pallas_call(
            kernel,
            grid=grid,
            in_specs=[q_spec, kv_spec, kv_spec, bias_spec],
            out_specs=[ctx_spec, w_spec],
            out_shape=(
                jax.ShapeDtypeStruct((bs, q_len, dim), jnp.float32),
                jax.ShapeDtypeStruct((bs, n_heads, q_len, k_len), jnp.float32),
            ),
            compiler_params=cp,
        )(q, k, v, bias)
        return ctx, weights

    kernel = functools.partial(_attn_kernel_noweights,
                               n_heads=n_heads, compute_dtype=compute_dtype)
    ctx = pl.pallas_call(
        kernel,
        grid=grid,
        in_specs=[q_spec, kv_spec, kv_spec, bias_spec],
        out_specs=ctx_spec,
        out_shape=jax.ShapeDtypeStruct((bs, q_len, dim), jnp.float32),
        compiler_params=cp,
    )(q, k, v, bias)
    return ctx, None


# ----------------------------------------------------------------------------
# Module-level forward (glue in plain JAX: weight prep / reshapes only)
# ----------------------------------------------------------------------------
def multihead_self_attention(query, key, value, mask, params, n_heads,
                             output_attention=False, fuse_qkv=True,
                             compute_dtype=jnp.bfloat16):
    # query/key/value: (bs, seq, dim) ; mask: (bs, k_len), value 0 => masked.
    # fuse_qkv=True assumes query is key is value (self-attention, the DistilBERT case).
    bs, q_len, dim = query.shape
    k_len = key.shape[1]
    dim_per_head = dim // n_heads

    # Fold the 1/sqrt(dim_per_head) scale into the q projection (weight and bias).
    scale = 1.0 / jnp.sqrt(jnp.float32(dim_per_head))
    wq = params["wq"] * scale
    bq = params["bq"] * scale

    if fuse_qkv:
        # Single fused projection: x @ [Wq^T | Wk^T | Wv^T] + [bq|bk|bv]
        wt_qkv = jnp.concatenate([wq.T, params["wk"].T, params["wv"].T], axis=1)  # (dim, 3*dim)
        b_qkv = jnp.concatenate([bq, params["bk"], params["bv"]])                 # (3*dim,)
        qkv = pallas_linear(query.reshape(-1, dim), wt_qkv, b_qkv,
                            compute_dtype=compute_dtype).reshape(bs, q_len, 3 * dim)
        q = qkv[..., :dim]
        k = qkv[..., dim:2 * dim]
        v = qkv[..., 2 * dim:]
    else:
        q = pallas_linear(query.reshape(-1, dim), wq.T, bq,
                          compute_dtype=compute_dtype).reshape(bs, q_len, dim)
        k = pallas_linear(key.reshape(-1, dim), params["wk"].T, params["bk"],
                          compute_dtype=compute_dtype).reshape(bs, k_len, dim)
        v = pallas_linear(value.reshape(-1, dim), params["wv"].T, params["bv"],
                          compute_dtype=compute_dtype).reshape(bs, k_len, dim)

    # Additive mask bias computed once per call (0 keep / finfo.min masked).
    min_val = jnp.finfo(jnp.float32).min
    bias = jnp.where(mask.reshape(bs, 1, k_len) == 0, min_val, 0.0).astype(jnp.float32)

    ctx, weights = pallas_attention(q, k, v, bias, n_heads,
                                    output_attention=output_attention,
                                    compute_dtype=compute_dtype)

    # out_lin, then restore the TT [1, bs, seq, dim] layout
    out = pallas_linear(ctx.reshape(-1, dim), params["wo"].T, params["bo"],
                        compute_dtype=compute_dtype).reshape(1, bs, q_len, dim)

    if output_attention:
        return (out, weights)
    return (out,)


# ----------------------------------------------------------------------------
# Pure-JAX reference (mirrors the PyTorch module) for a numerical sanity check
# ----------------------------------------------------------------------------
def reference_mha(query, key, value, mask, params, n_heads):
    bs, q_len, dim = query.shape
    k_len = key.shape[1]
    dh = dim // n_heads

    def lin(x, w, b):
        return x @ w.T + b

    def shape(x):
        return x.reshape(bs, -1, n_heads, dh).transpose(0, 2, 1, 3)

    q = shape(lin(query, params["wq"], params["bq"])) / jnp.sqrt(jnp.float32(dh))
    k = shape(lin(key, params["wk"], params["bk"]))
    v = shape(lin(value, params["wv"], params["bv"]))
    scores = jnp.einsum("bhqd,bhkd->bhqk", q, k)
    min_val = jnp.finfo(jnp.float32).min
    scores = jnp.where(mask.reshape(bs, 1, 1, k_len) == 0, min_val, scores)
    weights = jax.nn.softmax(scores, axis=-1)
    ctx = jnp.einsum("bhqk,bhkd->bhqd", weights, v)
    ctx = ctx.transpose(0, 2, 1, 3).reshape(bs, q_len, dim)
    out = lin(ctx, params["wo"], params["bo"]).reshape(1, bs, q_len, dim)
    return out, weights


# ----------------------------------------------------------------------------
if __name__ == "__main__":
    bs, seq, dim, n_heads = 2, 8, 32, 4

    root = jax.random.PRNGKey(0)
    keys = jax.random.split(root, 12)

    def init_w(k):
        return (0.02 * jax.random.normal(k, (dim, dim))).astype(jnp.float32)

    def init_b(k):
        return (0.02 * jax.random.normal(k, (dim,))).astype(jnp.float32)

    params = {
        "wq": init_w(keys[0]), "bq": init_b(keys[1]),
        "wk": init_w(keys[2]), "bk": init_b(keys[3]),
        "wv": init_w(keys[4]), "bv": init_b(keys[5]),
        "wo": init_w(keys[6]), "bo": init_b(keys[7]),
    }

    hidden = jax.random.normal(keys[8], (bs, seq, dim), jnp.float32)
    # attention mask: 1 = attend, 0 = masked (matches `mask == 0` fill semantics)
    mask = (jax.random.uniform(keys[11], (bs, seq)) > 0.2).astype(jnp.float32)
    mask = mask.at[:, 0].set(1.0)  # guarantee at least one attendable position per row

    # Self-attention path: fused QKV, attention weights returned.
    fwd = jax.jit(functools.partial(multihead_self_attention, n_heads=n_heads,
                                    output_attention=True, fuse_qkv=True))
    context, attn_weights = fwd(hidden, hidden, hidden, mask, params)
    jax.block_until_ready((context, attn_weights))

    assert context.shape == (1, bs, seq, dim)
    assert attn_weights.shape == (bs, n_heads, seq, seq)

    ref_out, ref_w = reference_mha(hidden, hidden, hidden, mask, params, n_heads)
    assert jnp.allclose(context, ref_out, atol=5e-2, rtol=5e-2)
    assert jnp.allclose(attn_weights, ref_w, atol=5e-2, rtol=5e-2)

    # Also exercise the non-fused (distinct q/k/v inputs) and no-weights kernel variant.
    key_in = jax.random.normal(keys[9], (bs, seq, dim), jnp.float32)
    value_in = jax.random.normal(keys[10], (bs, seq, dim), jnp.float32)
    fwd2 = jax.jit(functools.partial(multihead_self_attention, n_heads=n_heads,
                                     output_attention=False, fuse_qkv=False))
    (ctx2,) = fwd2(hidden, key_in, value_in, mask, params)
    jax.block_until_ready(ctx2)
    assert ctx2.shape == (1, bs, seq, dim)

    print("KERNEL_OK")
</pallas_src>

<mosaic_0001>
module attributes {stable_mosaic.version = 11 : i64} {
  func.func @_linear_kernel(%arg0: i32, %arg1: i32, %arg2: memref<16x32xf32, #tpu.memory_space<vmem>>, %arg3: memref<32x96xf32, #tpu.memory_space<vmem>>, %arg4: memref<1x96xf32, #tpu.memory_space<vmem>>, %arg5: memref<16x96xf32, #tpu.memory_space<vmem>>) attributes {dimension_semantics = [#tpu.dimension_semantics<parallel>, #tpu.dimension_semantics<parallel>], iteration_bounds = array<i64: 1, 1>, scalar_prefetch = 0 : i64, scratch_operands = 0 : i64, tpu.core_type = #tpu.core_type<tc>, window_params = [{transform_indices = @transform_0, window_bounds = array<i64: 16, 32>}, {transform_indices = @transform_1, window_bounds = array<i64: 32, 96>}, {transform_indices = @transform_2, window_bounds = array<i64: 1, 96>}, {transform_indices = @transform_3, window_bounds = array<i64: 16, 96>}]} {
    %c0 = arith.constant 0 : index
    %c0_0 = arith.constant 0 : index
    %0 = vector.load %arg2[%c0, %c0_0] : memref<16x32xf32, #tpu.memory_space<vmem>>, vector<16x32xf32>
    %1 = arith.truncf %0 : vector<16x32xf32> to vector<16x32xbf16>
    %c0_1 = arith.constant 0 : index
    %c0_2 = arith.constant 0 : index
    %2 = vector.load %arg3[%c0_1, %c0_2] : memref<32x96xf32, #tpu.memory_space<vmem>>, vector<32x96xf32>
    %3 = arith.truncf %2 : vector<32x96xf32> to vector<32x96xbf16>
    %cst = arith.constant dense<0.000000e+00> : vector<16x96xf32>
    %4 = tpu.matmul %1, %3, %cst {dimension_numbers = #tpu.dot_dimension_numbers<[1], [0], [0], [1], [0, 0, 1, 1], [], []>} : vector<16x32xbf16>, vector<32x96xbf16>, vector<16x96xf32> -> vector<16x96xf32>
    %c0_3 = arith.constant 0 : index
    %c0_4 = arith.constant 0 : index
    %5 = vector.load %arg4[%c0_3, %c0_4] : memref<1x96xf32, #tpu.memory_space<vmem>>, vector<1x96xf32>
    %6 = vector.broadcast %5 : vector<1x96xf32> to vector<16x96xf32>
    %7 = arith.addf %4, %6 : vector<16x96xf32>
    %c0_5 = arith.constant 0 : index
    %c0_6 = arith.constant 0 : index
    %8 = vector.load %arg5[%c0_5, %c0_6] : memref<16x96xf32, #tpu.memory_space<vmem>>, vector<16x96xf32>
    tpu.vector_store %arg5[%c0_5, %c0_6], %7 {strides = array<i32>} : memref<16x96xf32, #tpu.memory_space<vmem>>, vector<16x96xf32>,
    return
  }
  func.func @transform_0(%arg0: i32, %arg1: i32) -> (i32, i32) {
    %c0_i32 = arith.constant 0 : i32
    %c0_i32_0 = arith.constant 0 : i32
    return %arg0, %c0_i32 : i32, i32
  }
  func.func @transform_1(%arg0: i32, %arg1: i32) -> (i32, i32) {
    %c0_i32 = arith.constant 0 : i32
    %c0_i32_0 = arith.constant 0 : i32
    return %c0_i32, %arg1 : i32, i32
  }
  func.func @transform_2(%arg0: i32, %arg1: i32) -> (i32, i32) {
    %c0_i32 = arith.constant 0 : i32
    %c0_i32_0 = arith.constant 0 : i32
    return %c0_i32, %arg1 : i32, i32
  }
  func.func @transform_3(%arg0: i32, %arg1: i32) -> (i32, i32) {
    %c0_i32 = arith.constant 0 : i32
    return %arg0, %arg1 : i32, i32
  }
}

module attributes {stable_mosaic.version = 11 : i64} {
  func.func @_linear_kernel(%arg0: i32, %arg1: i32, %arg2: memref<16x32xf32, #tpu.memory_space<vmem>>, %arg3: memref<32x32xf32, #tpu.memory_space<vmem>>, %arg4: memref<1x32xf32, #tpu.memory_space<vmem>>, %arg5: memref<16x32xf32, #tpu.memory_space<vmem>>) attributes {dimension_semantics = [#tpu.dimension_semantics<parallel>, #tpu.dimension_semantics<parallel>], iteration_bounds = array<i64: 1, 1>, scalar_prefetch = 0 : i64, scratch_operands = 0 : i64, tpu.core_type = #tpu.core_type<tc>, window_params = [{transform_indices = @transform_0, window_bounds = array<i64: 16, 32>}, {transform_indices = @transform_1, window_bounds = array<i64: 32, 32>}, {transform_indices = @transform_2, window_bounds = array<i64: 1, 32>}, {transform_indices = @transform_3, window_bounds = array<i64: 16, 32>}]} {
    %c0 = arith.constant 0 : index
    %c0_0 = arith.constant 0 : index
    %0 = vector.load %arg2[%c0, %c0_0] : memref<16x32xf32, #tpu.memory_space<vmem>>, vector<16x32xf32>
    %1 = arith.truncf %0 : vector<16x32xf32> to vector<16x32xbf16>
    %c0_1 = arith.constant 0 : index
    %c0_2 = arith.constant 0 : index
    %2 = vector.load %arg3[%c0_1, %c0_2] : memref<32x32xf32, #tpu.memory_space<vmem>>, vector<32x32xf32>
    %3 = arith.truncf %2 : vector<32x32xf32> to vector<32x32xbf16>
    %cst = arith.constant dense<0.000000e+00> : vector<16x32xf32>
    %4 = tpu.matmul %1, %3, %cst {dimension_numbers = #tpu.dot_dimension_numbers<[1], [0], [0], [1], [0, 0, 1, 1], [], []>} : vector<16x32xbf16>, vector<32x32xbf16>, vector<16x32xf32> -> vector<16x32xf32>
    %c0_3 = arith.constant 0 : index
    %c0_4 = arith.constant 0 : index
    %5 = vector.load %arg4[%c0_3, %c0_4] : memref<1x32xf32, #tpu.memory_space<vmem>>, vector<1x32xf32>
    %6 = vector.broadcast %5 : vector<1x32xf32> to vector<16x32xf32>
    %7 = arith.addf %4, %6 : vector<16x32xf32>
    %c0_5 = arith.constant 0 : index
    %c0_6 = arith.constant 0 : index
    %8 = vector.load %arg5[%c0_5, %c0_6] : memref<16x32xf32, #tpu.memory_space<vmem>>, vector<16x32xf32>
    tpu.vector_store %arg5[%c0_5, %c0_6], %7 {strides = array<i32>} : memref<16x32xf32, #tpu.memory_space<vmem>>, vector<16x32xf32>,
    return
  }
  func.func @transform_0(%arg0: i32, %arg1: i32) -> (i32, i32) {
    %c0_i32 = arith.constant 0 : i32
    %c0_i32_0 = arith.constant 0 : i32
    return %arg0, %c0_i32 : i32, i32
  }
  func.func @transform_1(%arg0: i32, %arg1: i32) -> (i32, i32) {
    %c0_i32 = arith.constant 0 : i32
    %c0_i32_0 = arith.constant 0 : i32
    return %c0_i32, %arg1 : i32, i32
  }
  func.func @transform_2(%arg0: i32, %arg1: i32) -> (i32, i32) {
    %c0_i32 = arith.constant 0 : i32
    %c0_i32_0 = arith.constant 0 : i32
    return %c0_i32, %arg1 : i32, i32
  }
  func.func @transform_3(%arg0: i32, %arg1: i32) -> (i32, i32) {
    %c0_i32 = arith.constant 0 : i32
    return %arg0, %arg1 : i32, i32
  }
}

module attributes {stable_mosaic.version = 11 : i64} {
  func.func @_attn_kernel_with_weights(%arg0: i32, %arg1: i32, %arg2: memref<1x8x32xf32, #tpu.memory_space<vmem>>, %arg3: memref<1x8x32xf32, #tpu.memory_space<vmem>>, %arg4: memref<1x8x32xf32, #tpu.memory_space<vmem>>, %arg5: memref<1x1x8xf32, #tpu.memory_space<vmem>>, %arg6: memref<1x8x32xf32, #tpu.memory_space<vmem>>, %arg7: memref<1x4x8x8xf32, #tpu.memory_space<vmem>>) attributes {dimension_semantics = [#tpu.dimension_semantics<parallel>, #tpu.dimension_semantics<parallel>], iteration_bounds = array<i64: 2, 1>, scalar_prefetch = 0 : i64, scratch_operands = 0 : i64, tpu.core_type = #tpu.core_type<tc>, window_params = [{transform_indices = @transform_0, window_bounds = array<i64: 1, 8, 32>}, {transform_indices = @transform_1, window_bounds = array<i64: 1, 8, 32>}, {transform_indices = @transform_2, window_bounds = array<i64: 1, 8, 32>}, {transform_indices = @transform_3, window_bounds = array<i64: 1, 1, 8>}, {transform_indices = @transform_4, window_bounds = array<i64: 1, 8, 32>}, {transform_indices = @transform_5, window_bounds = array<i64: 1, 4, 8, 8>}]} {
    %c0 = arith.constant 0 : index
    %c0_0 = arith.constant 0 : index
    %c0_1 = arith.constant 0 : index
    %0 = vector.load %arg2[%c0, %c0_0, %c0_1] : memref<1x8x32xf32, #tpu.memory_space<vmem>>, vector<1x8x32xf32>
    %1 = vector.shape_cast %0 : vector<1x8x32xf32> to vector<8x32xf32>
    %2 = arith.truncf %1 : vector<8x32xf32> to vector<8x32xbf16>
    %c0_2 = arith.constant 0 : index
    %c0_3 = arith.constant 0 : index
    %c0_4 = arith.constant 0 : index
    %3 = vector.load %arg3[%c0_2, %c0_3, %c0_4] : memref<1x8x32xf32, #tpu.memory_space<vmem>>, vector<1x8x32xf32>
    %4 = vector.shape_cast %3 : vector<1x8x32xf32> to vector<8x32xf32>
    %5 = arith.truncf %4 : vector<8x32xf32> to vector<8x32xbf16>
    %c0_5 = arith.constant 0 : index
    %c0_6 = arith.constant 0 : index
    %c0_7 = arith.constant 0 : index
    %6 = vector.load %arg4[%c0_5, %c0_6, %c0_7] : memref<1x8x32xf32, #tpu.memory_space<vmem>>, vector<1x8x32xf32>
    %7 = vector.shape_cast %6 : vector<1x8x32xf32> to vector<8x32xf32>
    %8 = arith.truncf %7 : vector<8x32xf32> to vector<8x32xbf16>
    %c0_8 = arith.constant 0 : index
    %c0_9 = arith.constant 0 : index
    %c0_10 = arith.constant 0 : index
    %9 = vector.load %arg5[%c0_8, %c0_9, %c0_10] : memref<1x1x8xf32, #tpu.memory_space<vmem>>, vector<1x1x8xf32>
    %10 = vector.shape_cast %9 : vector<1x1x8xf32> to vector<1x8xf32>
    %11 = vector.extract_strided_slice %2 {offsets = [0, 0], sizes = [8, 8], strides = [1, 1]} : vector<8x32xbf16> to vector<8x8xbf16>
    %12 = vector.extract_strided_slice %5 {offsets = [0, 0], sizes = [8, 8], strides = [1, 1]} : vector<8x32xbf16> to vector<8x8xbf16>
    %cst = arith.constant dense<0.000000e+00> : vector<8x8xf32>
    %13 = tpu.matmul %11, %12, %cst {dimension_numbers = #tpu.dot_dimension_numbers<[1], [1], [0], [0], [0, 0, 1, 0], [], []>} : vector<8x8xbf16>, vector<8x8xbf16>, vector<8x8xf32> -> vector<8x8xf32>
    %14 = vector.broadcast %10 : vector<1x8xf32> to vector<8x8xf32>
    %15 = arith.addf %13, %14 : vector<8x8xf32>
    %cst_11 = arith.constant -3.40282347E+38 : f32
    %16 = vector.broadcast %cst_11 : f32 to vector<8x8xf32>
    %17 = arith.maximumf %15, %16 : vector<8x8xf32>
    %cst_12 = arith.constant dense<0xFF800000> : vector<8xf32>
    %18 = vector.multi_reduction <maximumf>, %17, %cst_12 [1] : vector<8x8xf32> to vector<8xf32>
    %19 = vector.shape_cast %18 : vector<8xf32> to vector<8x1xf32>
    %20 = vector.broadcast %19 : vector<8x1xf32> to vector<8x8xf32>
    %21 = arith.subf %17, %20 : vector<8x8xf32>
    %22 = math.exp %21 : vector<8x8xf32>
    %cst_13 = arith.constant dense<0.000000e+00> : vector<8xf32>
    %23 = vector.multi_reduction <add>, %22, %cst_13 [1] : vector<8x8xf32> to vector<8xf32>
    %24 = vector.shape_cast %23 : vector<8xf32> to vector<8x1xf32>
    %25 = tpu.reciprocal %24 {approx = true} : vector<8x1xf32> -> vector<8x1xf32>
    %26 = vector.broadcast %25 : vector<8x1xf32> to vector<8x8xf32>
    %27 = arith.mulf %22, %26 : vector<8x8xf32>
    %28 = arith.truncf %27 : vector<8x8xf32> to vector<8x8xbf16>
    %29 = vector.extract_strided_slice %8 {offsets = [0, 0], sizes = [8, 8], strides = [1, 1]} : vector<8x32xbf16> to vector<8x8xbf16>
    %cst_14 = arith.constant dense<0.000000e+00> : vector<8x8xf32>
    %30 = tpu.matmul %28, %29, %cst_14 {dimension_numbers = #tpu.dot_dimension_numbers<[1], [0], [0], [1], [0, 0, 1, 1], [], []>} : vector<8x8xbf16>, vector<8x8xbf16>, vector<8x8xf32> -> vector<8x8xf32>
    %c0_15 = arith.constant 0 : index
    %c0_16 = arith.constant 0 : index
    %c0_17 = arith.constant 0 : index
    %c0_18 = arith.constant 0 : index
    %31 = vector.load %arg7[%c0_15, %c0_16, %c0_17, %c0_18] : memref<1x4x8x8xf32, #tpu.memory_space<vmem>>, vector<1x1x8x8xf32>
    %32 = vector.shape_cast %31 : vector<1x1x8x8xf32> to vector<8x8xf32>
    %33 = vector.shape_cast %27 : vector<8x8xf32> to vector<1x1x8x8xf32>
    tpu.vector_store %arg7[%c0_15, %c0_16, %c0_17, %c0_18], %33 {strides = array<i32>} : memref<1x4x8x8xf32, #tpu.memory_space<vmem>>, vector<1x1x8x8xf32>,
    %34 = vector.extract_strided_slice %2 {offsets = [0, 8], sizes = [8, 8], strides = [1, 1]} : vector<8x32xbf16> to vector<8x8xbf16>
    %35 = vector.extract_strided_slice %5 {offsets = [0, 8], sizes = [8, 8], strides = [1, 1]} : vector<8x32xbf16> to vector<8x8xbf16>
    %cst_19 = arith.constant dense<0.000000e+00> : vector<8x8xf32>
    %36 = tpu.matmul %34, %35, %cst_19 {dimension_numbers = #tpu.dot_dimension_numbers<[1], [1], [0], [0], [0, 0, 1, 0], [], []>} : vector<8x8xbf16>, vector<8x8xbf16>, vector<8x8xf32> -> vector<8x8xf32>
    %37 = vector.broadcast %10 : vector<1x8xf32> to vector<8x8xf32>
    %38 = arith.addf %36, %37 : vector<8x8xf32>
    %cst_20 = arith.constant -3.40282347E+38 : f32
    %39 = vector.broadcast %cst_20 : f32 to vector<8x8xf32>
    %40 = arith.maximumf %38, %39 : vector<8x8xf32>
    %cst_21 = arith.constant dense<0xFF800000> : vector<8xf32>
    %41 = vector.multi_reduction <maximumf>, %40, %cst_21 [1] : vector<8x8xf32> to vector<8xf32>
    %42 = vector.shape_cast %41 : vector<8xf32> to vector<8x1xf32>
    %43 = vector.broadcast %42 : vector<8x1xf32> to vector<8x8xf32>
    %44 = arith.subf %40, %43 : vector<8x8xf32>
    %45 = math.exp %44 : vector<8x8xf32>
    %cst_22 = arith.constant dense<0.000000e+00> : vector<8xf32>
    %46 = vector.multi_reduction <add>, %45, %cst_22 [1] : vector<8x8xf32> to vector<8xf32>
    %47 = vector.shape_cast %46 : vector<8xf32> to vector<8x1xf32>
    %48 = tpu.reciprocal %47 {approx = true} : vector<8x1xf32> -> vector<8x1xf32>
    %49 = vector.broadcast %48 : vector<8x1xf32> to vector<8x8xf32>
    %50 = arith.mulf %45, %49 : vector<8x8xf32>
    %51 = arith.truncf %50 : vector<8x8xf32> to vector<8x8xbf16>
    %52 = vector.extract_strided_slice %8 {offsets = [0, 8], sizes = [8, 8], strides = [1, 1]} : vector<8x32xbf16> to vector<8x8xbf16>
    %cst_23 = arith.constant dense<0.000000e+00> : vector<8x8xf32>
    %53 = tpu.matmul %51, %52, %cst_23 {dimension_numbers = #tpu.dot_dimension_numbers<[1], [0], [0], [1], [0, 0, 1, 1], [], []>} : vector<8x8xbf16>, vector<8x8xbf16>, vector<8x8xf32> -> vector<8x8xf32>
    %c0_24 = arith.constant 0 : index
    %c1 = arith.constant 1 : index
    %c0_25 = arith.constant 0 : index
    %c0_26 = arith.constant 0 : index
    %54 = vector.load %arg7[%c0_24, %c1, %c0_25, %c0_26] : memref<1x4x8x8xf32, #tpu.memory_space<vmem>>, vector<1x1x8x8xf32>
    %55 = vector.shape_cast %54 : vector<1x1x8x8xf32> to vector<8x8xf32>
    %56 = vector.shape_cast %50 : vector<8x8xf32> to vector<1x1x8x8xf32>
    tpu.vector_store %arg7[%c0_24, %c1, %c0_25, %c0_26], %56 {strides = array<i32>} : memref<1x4x8x8xf32, #tpu.memory_space<vmem>>, vector<1x1x8x8xf32>,
    %57 = vector.extract_strided_slice %2 {offsets = [0, 16], sizes = [8, 8], strides = [1, 1]} : vector<8x32xbf16> to vector<8x8xbf16>
    %58 = vector.extract_strided_slice %5 {offsets = [0, 16], sizes = [8, 8], strides = [1, 1]} : vector<8x32xbf16> to vector<8x8xbf16>
    %cst_27 = arith.constant dense<0.000000e+00> : vector<8x8xf32>
    %59 = tpu.matmul %57, %58, %cst_27 {dimension_numbers = #tpu.dot_dimension_numbers<[1], [1], [0], [0], [0, 0, 1, 0], [], []>} : vector<8x8xbf16>, vector<8x8xbf16>, vector<8x8xf32> -> vector<8x8xf32>
    %60 = vector.broadcast %10 : vector<1x8xf32> to vector<8x8xf32>
    %61 = arith.addf %59, %60 : vector<8x8xf32>
    %cst_28 = arith.constant -3.40282347E+38 : f32
    %62 = vector.broadcast %cst_28 : f32 to vector<8x8xf32>
    %63 = arith.maximumf %61, %62 : vector<8x8xf32>
    %cst_29 = arith.constant dense<0xFF800000> : vector<8xf32>
    %64 = vector.multi_reduction <maximumf>, %63, %cst_29 [1] : vector<8x8xf32> to vector<8xf32>
    %65 = vector.shape_cast %64 : vector<8xf32> to vector<8x1xf32>
    %66 = vector.broadcast %65 : vector<8x1xf32> to vector<8x8xf32>
    %67 = arith.subf %63, %66 : vector<8x8xf32>
    %68 = math.exp %67 : vector<8x8xf32>
    %cst_30 = arith.constant dense<0.000000e+00> : vector<8xf32>
    %69 = vector.multi_reduction <add>, %68, %cst_30 [1] : vector<8x8xf32> to vector<8xf32>
    %70 = vector.shape_cast %69 : vector<8xf32> to vector<8x1xf32>
    %71 = tpu.reciprocal %70 {approx = true} : vector<8x1xf32> -> vector<8x1xf32>
    %72 = vector.broadcast %71 : vector<8x1xf32> to vector<8x8xf32>
    %73 = arith.mulf %68, %72 : vector<8x8xf32>
    %74 = arith.truncf %73 : vector<8x8xf32> to vector<8x8xbf16>
    %75 = vector.extract_strided_slice %8 {offsets = [0, 16], sizes = [8, 8], strides = [1, 1]} : vector<8x32xbf16> to vector<8x8xbf16>
    %cst_31 = arith.constant dense<0.000000e+00> : vector<8x8xf32>
    %76 = tpu.matmul %74, %75, %cst_31 {dimension_numbers = #tpu.dot_dimension_numbers<[1], [0], [0], [1], [0, 0, 1, 1], [], []>} : vector<8x8xbf16>, vector<8x8xbf16>, vector<8x8xf32> -> vector<8x8xf32>
    %c0_32 = arith.constant 0 : index
    %c2 = arith.constant 2 : index
    %c0_33 = arith.constant 0 : index
    %c0_34 = arith.constant 0 : index
    %77 = vector.load %arg7[%c0_32, %c2, %c0_33, %c0_34] : memref<1x4x8x8xf32, #tpu.memory_space<vmem>>, vector<1x1x8x8xf32>
    %78 = vector.shape_cast %77 : vector<1x1x8x8xf32> to vector<8x8xf32>
    %79 = vector.shape_cast %73 : vector<8x8xf32> to vector<1x1x8x8xf32>
    tpu.vector_store %arg7[%c0_32, %c2, %c0_33, %c0_34], %79 {strides = array<i32>} : memref<1x4x8x8xf32, #tpu.memory_space<vmem>>, vector<1x1x8x8xf32>,
    %80 = vector.extract_strided_slice %2 {offsets = [0, 24], sizes = [8, 8], strides = [1, 1]} : vector<8x32xbf16> to vector<8x8xbf16>
    %81 = vector.extract_strided_slice %5 {offsets = [0, 24], sizes = [8, 8], strides = [1, 1]} : vector<8x32xbf16> to vector<8x8xbf16>
    %cst_35 = arith.constant dense<0.000000e+00> : vector<8x8xf32>
    %82 = tpu.matmul %80, %81, %cst_35 {dimension_numbers = #tpu.dot_dimension_numbers<[1], [1], [0], [0], [0, 0, 1, 0], [], []>} : vector<8x8xbf16>, vector<8x8xbf16>, vector<8x8xf32> -> vector<8x8xf32>
    %83 = vector.broadcast %10 : vector<1x8xf32> to vector<8x8xf32>
    %84 = arith.addf %82, %83 : vector<8x8xf32>
    %cst_36 = arith.constant -3.40282347E+38 : f32
    %85 = vector.broadcast %cst_36 : f32 to vector<8x8xf32>
    %86 = arith.maximumf %84, %85 : vector<8x8xf32>
    %cst_37 = arith.constant dense<0xFF800000> : vector<8xf32>
    %87 = vector.multi_reduction <maximumf>, %86, %cst_37 [1] : vector<8x8xf32> to vector<8xf32>
    %88 = vector.shape_cast %87 : vector<8xf32> to vector<8x1xf32>
    %89 = vector.broadcast %88 : vector<8x1xf32> to vector<8x8xf32>
    %90 = arith.subf %86, %89 : vector<8x8xf32>
    %91 = math.exp %90 : vector<8x8xf32>
    %cst_38 = arith.constant dense<0.000000e+00> : vector<8xf32>
    %92 = vector.multi_reduction <add>, %91, %cst_38 [1] : vector<8x8xf32> to vector<8xf32>
    %93 = vector.shape_cast %92 : vector<8xf32> to vector<8x1xf32>
    %94 = tpu.reciprocal %93 {approx = true} : vector<8x1xf32> -> vector<8x1xf32>
    %95 = vector.broadcast %94 : vector<8x1xf32> to vector<8x8xf32>
    %96 = arith.mulf %91, %95 : vector<8x8xf32>
    %97 = arith.truncf %96 : vector<8x8xf32> to vector<8x8xbf16>
    %98 = vector.extract_strided_slice %8 {offsets = [0, 24], sizes = [8, 8], strides = [1, 1]} : vector<8x32xbf16> to vector<8x8xbf16>
    %cst_39 = arith.constant dense<0.000000e+00> : vector<8x8xf32>
    %99 = tpu.matmul %97, %98, %cst_39 {dimension_numbers = #tpu.dot_dimension_numbers<[1], [0], [0], [1], [0, 0, 1, 1], [], []>} : vector<8x8xbf16>, vector<8x8xbf16>, vector<8x8xf32> -> vector<8x8xf32>
    %c0_40 = arith.constant 0 : index
    %c3 = arith.constant 3 : index
    %c0_41 = arith.constant 0 : index
    %c0_42 = arith.constant 0 : index
    %100 = vector.load %arg7[%c0_40, %c3, %c0_41, %c0_42] : memref<1x4x8x8xf32, #tpu.memory_space<vmem>>, vector<1x1x8x8xf32>
    %101 = vector.shape_cast %100 : vector<1x1x8x8xf32> to vector<8x8xf32>
    %102 = vector.shape_cast %96 : vector<8x8xf32> to vector<1x1x8x8xf32>
    tpu.vector_store %arg7[%c0_40, %c3, %c0_41, %c0_42], %102 {strides = array<i32>} : memref<1x4x8x8xf32, #tpu.memory_space<vmem>>, vector<1x1x8x8xf32>,
    %103 = tpu.concatenate %30, %53, %76, %99 in 1 : vector<8x8xf32>, vector<8x8xf32>, vector<8x8xf32>, vector<8x8xf32> -> vector<8x32xf32>
    %c0_43 = arith.constant 0 : index
    %c0_44 = arith.constant 0 : index
    %c0_45 = arith.constant 0 : index
    %104 = vector.load %arg6[%c0_43, %c0_44, %c0_45] : memref<1x8x32xf32, #tpu.memory_space<vmem>>, vector<1x8x32xf32>
    %105 = vector.shape_cast %104 : vector<1x8x32xf32> to vector<8x32xf32>
    %106 = vector.shape_cast %103 : vector<8x32xf32> to vector<1x8x32xf32>
    tpu.vector_store %arg6[%c0_43, %c0_44, %c0_45], %106 {strides = array<i32>} : memref<1x8x32xf32, #tpu.memory_space<vmem>>, vector<1x8x32xf32>,
    return
  }
  func.func @transform_0(%arg0: i32, %arg1: i32) -> (i32, i32, i32) {
    %c0_i32 = arith.constant 0 : i32
    %c0_i32_0 = arith.constant 0 : i32
    return %arg0, %arg1, %c0_i32 : i32, i32, i32
  }
  func.func @transform_1(%arg0: i32, %arg1: i32) -> (i32, i32, i32) {
    %c0_i32 = arith.constant 0 : i32
    %c0_i32_0 = arith.constant 0 : i32
    %c0_i32_1 = arith.constant 0 : i32
    return %arg0, %c0_i32, %c0_i32_0 : i32, i32, i32
  }
  func.func @transform_2(%arg0: i32, %arg1: i32) -> (i32, i32, i32) {
    %c0_i32 = arith.constant 0 : i32
    %c0_i32_0 = arith.constant 0 : i32
    %c0_i32_1 = arith.constant 0 : i32
    return %arg0, %c0_i32, %c0_i32_0 : i32, i32, i32
  }
  func.func @transform_3(%arg0: i32, %arg1: i32) -> (i32, i32, i32) {
    %c0_i32 = arith.constant 0 : i32
    %c0_i32_0 = arith.constant 0 : i32
    %c0_i32_1 = arith.constant 0 : i32
    return %arg0, %c0_i32, %c0_i32_0 : i32, i32, i32
  }
  func.func @transform_4(%arg0: i32, %arg1: i32) -> (i32, i32, i32) {
    %c0_i32 = arith.constant 0 : i32
    %c0_i32_0 = arith.constant 0 : i32
    return %arg0, %arg1, %c0_i32 : i32, i32, i32
  }
  func.func @transform_5(%arg0: i32, %arg1: i32) -> (i32, i32, i32, i32) {
    %c0_i32 = arith.constant 0 : i32
    %c0_i32_0 = arith.constant 0 : i32
    %c0_i32_1 = arith.constant 0 : i32
    return %arg0, %c0_i32, %arg1, %c0_i32_0 : i32, i32, i32, i32
  }
}

</mosaic_0001>

<llo_original>
// kernel: multihead_self_attention.3
$region0: #{multihead_self_attention.3}
  #allocation0 [shape = 'u32[]', space=smem, size = 0x4, offset = 0x4, fixed_abs, tag = 'smem constant byte address 0x4 - core index']
  #allocation1 [shape = 'u32[144,128]{1,0:T(1,128)}', space=vmem, size = 0x12000, scoped, tag = 'internal scratch']
  %s0 = inlined_call_operand.vmem [shape: f32[16,32], index: 0, kind: input, shape index: {}]
  %s1 = inlined_call_operand.vmem [shape: f32[32,96], index: 1, kind: input, shape index: {}]
  %s2 = inlined_call_operand.vmem [shape: f32[1,96], index: 2, kind: input, shape index: {}]
  %s3 = inlined_call_operand.vmem [shape: f32[16,96], index: 3, kind: output, shape index: {}]
  %s4 = sld [smem:[#allocation0]]
  $region22: #{multihead_self_attention.3} parent=0
    _
  %s6 = ssub.s32 1, %s4
  %s7 = scalar_select 0, %s6, %s4
  // Predicated region
  $region2: #{multihead_self_attention.3} parent=0 // pred_check
    _
  $region3: #{multihead_self_attention.3} parent=0 // pred_check_branch
    %9 = sbr.rel (0) target = $region5
  $region4: #{multihead_self_attention.3} parent=0 // pred_region
    _
  $region5: #{multihead_self_attention.3} parent=0 // pred_fallthru
    _
  // Predicated region
  $region6: #{multihead_self_attention.3} parent=0 // pred_check
    _
  $region7: #{multihead_self_attention.3} parent=0 // pred_check_branch
    %11 = sbr.rel (0) target = $region9
  $region8: #{multihead_self_attention.3} parent=0 // pred_region
    _
  $region9: #{multihead_self_attention.3} parent=0 // pred_fallthru
    _
  // Predicated region
  $region10: #{multihead_self_attention.3} parent=0 // pred_check
    _
  $region11: #{multihead_self_attention.3} parent=0 // pred_check_branch
    %13 = sbr.rel (0) target = $region13
  $region12: #{multihead_self_attention.3} parent=0 // pred_region
    _
  $region13: #{multihead_self_attention.3} parent=0 // pred_fallthru
    _
  %v15 = vld [vmem:[%s0] sm:$0xff]
  %v16 = vld [vmem:[%s0 + $0x8] sm:$0xff]
  %v17 = vpack.c.bf16 %v16, %v15
  %v18 = vld [vmem:[%s1] sm:$0xff]
  %v19 = vld [vmem:[%s1 + $0x8] sm:$0xff]
  %v20 = vld [vmem:[%s1 + $0x10] sm:$0xff]
  %v21 = vld [vmem:[%s1 + $0x18] sm:$0xff]
  %v22 = vpack.c.bf16 %v19, %v18
  %v23 = vpack.c.bf16 %v21, %v20
  %v24 = vld [vmem:[%s2] sm:$0x1]
  %v26 = vlaneseq
  %v27 = vshrl.u32 %v26, 7
  %v28 = vsub.s32 0, %v27
  %v29 = vrot.slane %v24, %v28
  %vm31 = vcmask 261120
  %v33 = vsel %vm31, %v17, 0
  %35 = vmatprep.subr.bf16.mxu0 0
  %36 = vmatpush1.bf16.msra.mxu0 0
  %37 = vmatprep.subr.bf16.mxu0 0
  %38 = vmatpush1.bf16.msra.mxu0 0
  %39 = vmatprep.subr.bf16.mxu0 0
  %40 = vmatpush1.bf16.msra.mxu0 0
  %41 = vmatprep.subr.bf16.mxu0 0
  %42 = vmatpush1.bf16.msra.mxu0 0
  %43 = vmatprep.subr.bf16.mxu0 0
  %44 = vmatpush1.bf16.msra.mxu0 0
  %45 = vmatprep.subr.bf16.mxu0 0
  %46 = vmatpush1.bf16.msra.mxu0 0
  %47 = vmatprep.subr.bf16.mxu0 0
  %48 = vmatpush1.bf16.msra.mxu0 %v23
  %49 = vmatprep.subr.bf16.mxu0 0
  %50 = vmatpush1.bf16.msra.mxu0 %v22
  %51 = vmatprep.subr.bf16.mxu0 0
  %52 = vmatpush2.bf16.msra.mxu0 0
  %53 = vmatprep.subr.bf16.mxu0 0
  %54 = vmatpush2.bf16.msra.mxu0 0
  %55 = vmatprep.subr.bf16.mxu0 0
  %56 = vmatpush2.bf16.msra.mxu0 0
  %57 = vmatprep.subr.bf16.mxu0 0
  %58 = vmatpush2.bf16.msra.mxu0 0
  %59 = vmatprep.subr.bf16.mxu0 0
  %60 = vmatpush2.bf16.msra.mxu0 0
  %61 = vmatprep.subr.bf16.mxu0 0
  %62 = vmatpush2.bf16.msra.mxu0 0
  %63 = vmatprep.subr.bf16.mxu0 0
  %64 = vmatpush2.bf16.msra.mxu0 0
  %65 = vmatprep.subr.bf16.mxu0 0
  %66 = vmatpush2.bf16.msra.mxu0 0
  %67 = vmatprep.mubr.bf16.mxu0 0
  %68 = vmatmul.mubr.bf16.gmra.mxu0 %v33
  %v69 = vpop.f32.mrf.mxu0
  %v70 = vadd.f32 %v29, %v69
  %v71 = vpop.f32.mrf.mxu0
  %v72 = vpop.f32.mrf.mxu0
  %v73 = vadd.f32 %v29, %v72
  %v74 = vpop.f32.mrf.mxu0
  %75 = vdwg.mxu0
  %vm76 = vcmask 785408
  %77 = vst.msk [vmem:[%s3] sm:$0xff] %vm76, %v70
  %78 = vst.msk [vmem:[%s3 + $0x8] sm:$0xff] %vm76, %v73
  // Predicated region
  $region14: #{multihead_self_attention.3} parent=0 // pred_check
    _
  $region15: #{multihead_self_attention.3} parent=0 // pred_check_branch
    %80 = sbr.rel (0) target = $region17
  $region16: #{multihead_self_attention.3} parent=0 // pred_region
    _
  $region17: #{multihead_self_attention.3} parent=0 // pred_fallthru
    _
  // Predicated region
  $region18: #{multihead_self_attention.3} parent=0 // pred_check
    _
  $region19: #{multihead_self_attention.3} parent=0 // pred_check_branch
    %82 = sbr.rel (0) target = $region21
  $region20: #{multihead_self_attention.3} parent=0 // pred_region
    _
  $region21: #{multihead_self_attention.3} parent=0 // pred_fallthru
    _

// kernel: multihead_self_attention.5
$region0: #{multihead_self_attention.5}
  #allocation0 [shape = 'u32[]', space=smem, size = 0x4, offset = 0x4, fixed_abs, tag = 'smem constant byte address 0x4 - core index']
  #allocation1 [shape = 'u32[144,128]{1,0:T(1,128)}', space=vmem, size = 0x12000, scoped, tag = 'internal scratch']
  %s0 = inlined_call_operand.vmem [shape: f32[16,32], index: 0, kind: input, shape index: {}]
  %s1 = inlined_call_operand.vmem [shape: f32[32,32], index: 1, kind: input, shape index: {}]
  %s2 = inlined_call_operand.vmem [shape: f32[1,32], index: 2, kind: input, shape index: {}]
  %s3 = inlined_call_operand.hbm [shape: f32[16,32], index: 3, kind: output, shape index: {}]
  %s4 = sld [smem:[#allocation0]]
  $region22: #{multihead_self_attention.5} parent=0
    _
  %s6 = ssub.s32 1, %s4
  %s7 = scalar_select 0, %s6, %s4
  $region1: #{multihead_self_attention.5} parent=0
    #allocation2 [shape = 'u8[8192]{0}', space=vmem, size = 0x2000, scoped, tag = 'output window, operand 0, single buffered']
    #allocation3 [shape = 's32[1]{0}', space=sflag, size = 0x4, scoped, tag = 'scoped memory for multihead_self_attention.5']
    %8 = vsyncpa [#allocation3], 0
    // Predicated region
    $region2: #{multihead_self_attention.5} parent=1 // pred_check
      _
    $region3: #{multihead_self_attention.5} parent=1 // pred_check_branch
      %10 = sbr.rel (0) target = $region5
    $region4: #{multihead_self_attention.5} parent=1 // pred_region
      _
    $region5: #{multihead_self_attention.5} parent=1 // pred_fallthru
      _
    // Predicated region
    $region6: #{multihead_self_attention.5} parent=1 // pred_check
      _
    $region7: #{multihead_self_attention.5} parent=1 // pred_check_branch
      %12 = sbr.rel (0) target = $region9
    $region8: #{multihead_self_attention.5} parent=1 // pred_region
      _
    $region9: #{multihead_self_attention.5} parent=1 // pred_fallthru
      _
    // Predicated region
    $region10: #{multihead_self_attention.5} parent=1 // pred_check
      _
    $region11: #{multihead_self_attention.5} parent=1 // pred_check_branch
      %14 = sbr.rel (0) target = $region13
    $region12: #{multihead_self_attention.5} parent=1 // pred_region
      _
    $region13: #{multihead_self_attention.5} parent=1 // pred_fallthru
      _
    %v16 = vld [vmem:[%s0] sm:$0xff]
    %v17 = vld [vmem:[%s0 + $0x8] sm:$0xff]
    %v18 = vpack.c.bf16 %v17, %v16
    %v19 = vld [vmem:[%s1] sm:$0xff]
    %v20 = vld [vmem:[%s1 + $0x8] sm:$0xff]
    %v21 = vld [vmem:[%s1 + $0x10] sm:$0xff]
    %v22 = vld [vmem:[%s1 + $0x18] sm:$0xff]
    %v23 = vpack.c.bf16 %v20, %v19
    %v24 = vpack.c.bf16 %v22, %v21
    %v25 = vld [vmem:[%s2] sm:$0x1]
    %v27 = vlaneseq
    %v28 = vshrl.u32 %v27, 7
    %v29 = vsub.s32 0, %v28
    %v30 = vrot.slane %v25, %v29
    %vm32 = vcmask 261120
    %v34 = vsel %vm32, %v18, 0
    %36 = vmatprep.subr.bf16.mxu0 0
    %37 = vmatpush1.bf16.msra.mxu0 0
    %38 = vmatprep.subr.bf16.mxu0 0
    %39 = vmatpush1.bf16.msra.mxu0 0
    %40 = vmatprep.subr.bf16.mxu0 0
    %41 = vmatpush1.bf16.msra.mxu0 0
    %42 = vmatprep.subr.bf16.mxu0 0
    %43 = vmatpush1.bf16.msra.mxu0 0
    %44 = vmatprep.subr.bf16.mxu0 0
    %45 = vmatpush1.bf16.msra.mxu0 0
    %46 = vmatprep.subr.bf16.mxu0 0
    %47 = vmatpush1.bf16.msra.mxu0 0
    %48 = vmatprep.subr.bf16.mxu0 0
    %49 = vmatpush1.bf16.msra.mxu0 %v24
    %50 = vmatprep.subr.bf16.mxu0 0
    %51 = vmatpush1.bf16.msra.mxu0 %v23
    %52 = vmatprep.subr.bf16.mxu0 0
    %53 = vmatpush2.bf16.msra.mxu0 0
    %54 = vmatprep.subr.bf16.mxu0 0
    %55 = vmatpush2.bf16.msra.mxu0 0
    %56 = vmatprep.subr.bf16.mxu0 0
    %57 = vmatpush2.bf16.msra.mxu0 0
    %58 = vmatprep.subr.bf16.mxu0 0
    %59 = vmatpush2.bf16.msra.mxu0 0
    %60 = vmatprep.subr.bf16.mxu0 0
    %61 = vmatpush2.bf16.msra.mxu0 0
    %62 = vmatprep.subr.bf16.mxu0 0
    %63 = vmatpush2.bf16.msra.mxu0 0
    %64 = vmatprep.subr.bf16.mxu0 0
    %65 = vmatpush2.bf16.msra.mxu0 0
    %66 = vmatprep.subr.bf16.mxu0 0
    %67 = vmatpush2.bf16.msra.mxu0 0
    %68 = vmatprep.mubr.bf16.mxu0 0
    %69 = vmatmul.mubr.bf16.gmra.mxu0 %v34
    %v70 = vpop.f32.mrf.mxu0
    %v71 = vadd.f32 %v30, %v70
    %v72 = vpop.f32.mrf.mxu0
    %v73 = vpop.f32.mrf.mxu0
    %v74 = vadd.f32 %v30, %v73
    %v75 = vpop.f32.mrf.mxu0
    %76 = vdwg.mxu0
    %77 = vst.msk [vmem:[#allocation2] sm:$0xff] %vm32, %v71
    %78 = vst.msk [vmem:[#allocation2 + $0x8] sm:$0xff] %vm32, %v74
    // Predicated region
    $region14: #{multihead_self_attention.5} parent=1 // pred_check
      _
    $region15: #{multihead_self_attention.5} parent=1 // pred_check_branch
      %80 = sbr.rel (0) target = $region17
    $region16: #{multihead_self_attention.5} parent=1 // pred_region
      %s82 = ssub.s32 256, 256
      %83 = vsyncadd [#allocation3], %s82
      %s84 = sshll.u32 [#allocation2], 4
      %s85 = int_to_ptr.vmem [resolvable:$true] %s84
      %90 = dma.vmem_to_hbm [thread:$0]  %s85, 256, %s3, [#allocation3], 128, 128, 8
    $region17: #{multihead_self_attention.5} parent=1 // pred_fallthru
      _
    // Predicated region
    $region18: #{multihead_self_attention.5} parent=1 // pred_check
      _
    $region19: #{multihead_self_attention.5} parent=1 // pred_check_branch
      %92 = sbr.rel (0) target = $region21
    $region20: #{multihead_self_attention.5} parent=1 // pred_region
      %93 = dma.done [#allocation3], 256
    $region21: #{multihead_self_attention.5} parent=1 // pred_fallthru
      _
    %94 = vsyncpa [#allocation3], 1

// kernel: multihead_self_attention.4
$region0: #{multihead_self_attention.4}
  #allocation0 [shape = 'u32[]', space=smem, size = 0x4, offset = 0x4, fixed_abs, tag = 'smem constant byte address 0x4 - core index']
  #allocation1 [shape = 'u32[144,128]{1,0:T(1,128)}', space=vmem, size = 0x12000, scoped, tag = 'internal scratch']
  %s0 = inlined_call_operand.vmem [shape: f32[2,8,32], index: 0, kind: input, shape index: {}]
  %s1 = inlined_call_operand.vmem [shape: f32[2,8,32], index: 1, kind: input, shape index: {}]
  %s2 = inlined_call_operand.vmem [shape: f32[2,8,32], index: 2, kind: input, shape index: {}]
  %s3 = inlined_call_operand.vmem [shape: f32[2,1,8], index: 3, kind: input, shape index: {}]
  %s4 = inlined_call_operand.vmem [shape: f32[2,8,32], index: 4, kind: output, shape index: {0}]
  %s5 = inlined_call_operand.hbm [shape: f32[2,4,8,8], index: 5, kind: output, shape index: {1}]
  %6 = xla_tuple %s4, %s5
  %s7 = sld [smem:[#allocation0]]
  $region57: #{multihead_self_attention.4} parent=0
    _
  %s9 = ssub.s32 1, %s7
  %s10 = scalar_select 0, %s9, %s7
  $region1: #{multihead_self_attention.4} parent=0
    #allocation2 [shape = 'u8[32768]{0}', space=vmem, size = 0x8000, scoped, tag = 'output window, operand 1']
    #allocation3 [shape = 's32[2]{0}', space=sflag, size = 0x8, scoped, tag = 'scoped memory for multihead_self_attention.4']
    %11 = vsyncpa [#allocation3], 0
    %s12 = scalar_lea.sflag [#allocation3], 1
    %13 = vsyncpa %s12, 0
    loop: start=0, step=1, limit=4
    $region2: #{multihead_self_attention.4} parent=1 // loop_pre_header
      _
    $region3: #{multihead_self_attention.4} parent=1 // loop_header
      %s15 = sphi 0, %s19
      %p16 = scmp.ge.s32.totalorder %s15, 4
      %s22 = sphi 0, %s34
      %s23 = sphi 0, %s30
      %s24 = sphi 0, %s22
      %s25 = sphi 0, %s23
      %s26 = sphi 0, %s24
      %s27 = sphi 0, %s25
      %s39 = sphi 0, %s41
      %s42 = sphi 0, %s39
      %s43 = sphi 0, %s42
      %s59 = sphi 0, %s43
      %s65 = sphi 0, %s67
      %s68 = sphi 0, %s65
      %s69 = sphi 0, %s68
      %s85 = sphi 0, %s69
      %s91 = sphi 0, %s93
      %s94 = sphi 0, %s91
      %s95 = sphi 0, %s94
      %s111 = sphi 0, %s95
      %s117 = sphi 0, %s119
      %s120 = sphi 0, %s117
      %s121 = sphi 0, %s120
      %s137 = sphi 0, %s121
      %s145 = sphi 0, %s147
      %s148 = sphi 0, %s145
      %s149 = sphi 0, %s148
      %s165 = sphi 0, %s149
      %s173 = sphi 0, %s175
      %s176 = sphi 0, %s173
      %s177 = sphi 0, %s176
      %s193 = sphi 0, %s177
    $region4: #{multihead_self_attention.4} parent=1 // loop_header_branch
      %18 = sbr.rel (%p16) target = $region8
    $region5: #{multihead_self_attention.4} parent=1 // loop_body
      %s20 = ssub.s32 %s15, 1
      %s21 = ssub.s32 %s15, 2
      %s28 = sadd.s32 1, %s23
      %p29 = scmp.ge.s32.totalorder %s28, 1
      %s30 = scalar_select %p29, 0, %s28
      %s31 = sadd.s32 1, %s22
      %s32 = scalar_select %p29, %s31, %s22
      %p33 = scmp.ge.s32.totalorder %s32, 2
      %s34 = scalar_select %p33, 0, %s32
      %s35 = ssub.s32 %s22, %s34
      %s36 = ssub.s32 %s23, %s30
      %s37 = sor.u32 %s35, %s36
      %p38 = scmp.eq.s32.totalorder %s37, 0
      %s40 = sadd.s32 %s39, 1
      %s41 = scalar_select %p38, %s39, %s40
      %p44 = pneg %p38
      %p45 = scmp.eq.s32.totalorder %s15, 1
      %p46 = por %p44, %p45
      %p47 = scmp.ne.s32.totalorder %s39, %s42
      %p48 = scmp.eq.s32.totalorder %s15, 0
      %p49 = por %p47, %p48
      %p50 = scmp.ne.s32.totalorder %s39, %s42
      %p51 = scmp.eq.s32.totalorder %s20, 1
      %p52 = por %p50, %p51
      %p53 = scmp.ne.s32.totalorder %s42, %s43
      %p54 = scmp.eq.s32.totalorder %s20, 0
      %p55 = por %p53, %p54
      %p56 = scmp.ne.s32.totalorder %s42, %s43
      %p57 = scmp.eq.s32.totalorder %s21, 1
      %p58 = por %p56, %p57
      %p60 = scmp.ne.s32.totalorder %s43, %s59
      %p61 = scmp.eq.s32.totalorder %s21, 0
      %p62 = por %p60, %p61
      %s63 = ssub.s32 %s22, %s34
      %p64 = scmp.eq.s32.totalorder %s63, 0
      %s66 = sadd.s32 %s65, 1
      %s67 = scalar_select %p64, %s65, %s66
      %p70 = pneg %p64
      %p71 = scmp.eq.s32.totalorder %s15, 1
      %p72 = por %p70, %p71
      %p73 = scmp.ne.s32.totalorder %s65, %s68
      %p74 = scmp.eq.s32.totalorder %s15, 0
      %p75 = por %p73, %p74
      %p76 = scmp.ne.s32.totalorder %s65, %s68
      %p77 = scmp.eq.s32.totalorder %s20, 1
      %p78 = por %p76, %p77
      %p79 = scmp.ne.s32.totalorder %s68, %s69
      %p80 = scmp.eq.s32.totalorder %s20, 0
      %p81 = por %p79, %p80
      %p82 = scmp.ne.s32.totalorder %s68, %s69
      %p83 = scmp.eq.s32.totalorder %s21, 1
      %p84 = por %p82, %p83
      %p86 = scmp.ne.s32.totalorder %s69, %s85
      %p87 = scmp.eq.s32.totalorder %s21, 0
      %p88 = por %p86, %p87
      %s89 = ssub.s32 %s22, %s34
      %p90 = scmp.eq.s32.totalorder %s89, 0
      %s92 = sadd.s32 %s91, 1
      %s93 = scalar_select %p90, %s91, %s92
      %p96 = pneg %p90
      %p97 = scmp.eq.s32.totalorder %s15, 1
      %p98 = por %p96, %p97
      %p99 = scmp.ne.s32.totalorder %s91, %s94
      %p100 = scmp.eq.s32.totalorder %s15, 0
      %p101 = por %p99, %p100
      %p102 = scmp.ne.s32.totalorder %s91, %s94
      %p103 = scmp.eq.s32.totalorder %s20, 1
      %p104 = por %p102, %p103
      %p105 = scmp.ne.s32.totalorder %s94, %s95
      %p106 = scmp.eq.s32.totalorder %s20, 0
      %p107 = por %p105, %p106
      %p108 = scmp.ne.s32.totalorder %s94, %s95
      %p109 = scmp.eq.s32.totalorder %s21, 1
      %p110 = por %p108, %p109
      %p112 = scmp.ne.s32.totalorder %s95, %s111
      %p113 = scmp.eq.s32.totalorder %s21, 0
      %p114 = por %p112, %p113
      %s115 = ssub.s32 %s22, %s34
      %p116 = scmp.eq.s32.totalorder %s115, 0
      %s118 = sadd.s32 %s117, 1
      %s119 = scalar_select %p116, %s117, %s118
      %p122 = pneg %p116
      %p123 = scmp.eq.s32.totalorder %s15, 1
      %p124 = por %p122, %p123
      %p125 = scmp.ne.s32.totalorder %s117, %s120
      %p126 = scmp.eq.s32.totalorder %s15, 0
      %p127 = por %p125, %p126
      %p128 = scmp.ne.s32.totalorder %s117, %s120
      %p129 = scmp.eq.s32.totalorder %s20, 1
      %p130 = por %p128, %p129
      %p131 = scmp.ne.s32.totalorder %s120, %s121
      %p132 = scmp.eq.s32.totalorder %s20, 0
      %p133 = por %p131, %p132
      %p134 = scmp.ne.s32.totalorder %s120, %s121
      %p135 = scmp.eq.s32.totalorder %s21, 1
      %p136 = por %p134, %p135
      %p138 = scmp.ne.s32.totalorder %s121, %s137
      %p139 = scmp.eq.s32.totalorder %s21, 0
      %p140 = por %p138, %p139
      %s141 = ssub.s32 %s22, %s34
      %s142 = ssub.s32 %s23, %s30
      %s143 = sor.u32 %s141, %s142
      %p144 = scmp.eq.s32.totalorder %s143, 0
      %s146 = sadd.s32 %s145, 1
      %s147 = scalar_select %p144, %s145, %s146
      %p150 = pneg %p144
      %p151 = scmp.eq.s32.totalorder %s15, 1
      %p152 = por %p150, %p151
      %p153 = scmp.ne.s32.totalorder %s145, %s148
      %p154 = scmp.eq.s32.totalorder %s15, 0
      %p155 = por %p153, %p154
      %p156 = scmp.ne.s32.totalorder %s145, %s148
      %p157 = scmp.eq.s32.totalorder %s20, 1
      %p158 = por %p156, %p157
      %p159 = scmp.ne.s32.totalorder %s148, %s149
      %p160 = scmp.eq.s32.totalorder %s20, 0
      %p161 = por %p159, %p160
      %p162 = scmp.ne.s32.totalorder %s148, %s149
      %p163 = scmp.eq.s32.totalorder %s21, 1
      %p164 = por %p162, %p163
      %p166 = scmp.ne.s32.totalorder %s149, %s165
      %p167 = scmp.eq.s32.totalorder %s21, 0
      %p168 = por %p166, %p167
      %s169 = ssub.s32 %s22, %s34
      %s170 = ssub.s32 %s23, %s30
      %s171 = sor.u32 %s169, %s170
      %p172 = scmp.eq.s32.totalorder %s171, 0
      %s174 = sadd.s32 %s173, 1
      %s175 = scalar_select %p172, %s173, %s174
      %p178 = pneg %p172
      %p179 = scmp.eq.s32.totalorder %s15, 1
      %p180 = por %p178, %p179
      %p181 = scmp.ne.s32.totalorder %s173, %s176
      %p182 = scmp.eq.s32.totalorder %s15, 0
      %p183 = por %p181, %p182
      %p184 = scmp.ne.s32.totalorder %s173, %s176
      %p185 = scmp.eq.s32.totalorder %s20, 1
      %p186 = por %p184, %p185
      %p187 = scmp.ne.s32.totalorder %s176, %s177
      %p188 = scmp.eq.s32.totalorder %s20, 0
      %p189 = por %p187, %p188
      %p190 = scmp.ne.s32.totalorder %s176, %s177
      %p191 = scmp.eq.s32.totalorder %s21, 1
      %p192 = por %p190, %p191
      %p194 = scmp.ne.s32.totalorder %s177, %s193
      %p195 = scmp.eq.s32.totalorder %s21, 0
      %p196 = por %p194, %p195
      %p197 = scmp.le.s32.totalorder 1, %s15
      %p198 = scmp.lt.s32.totalorder %s15, 3
      %p199 = pnand %p197, %p198
      %p200 = pneg %p199
      // Predicated region
      $region9: #{multihead_self_attention.4} parent=5 // pred_check
        _
      $region10: #{multihead_self_attention.4} parent=5 // pred_check_branch
        %202 = sbr.rel (%p199) target = $region12
      $region11: #{multihead_self_attention.4} parent=5 // pred_region
        %s203 = ssub.s32 %s15, 1
      $region12: #{multihead_self_attention.4} parent=5 // pred_fallthru
        _
      %p204 = scmp.lt.s32.totalorder %s15, 2
      // Predicated region
      $region13: #{multihead_self_attention.4} parent=5 // pred_check
        %p205 = pneg %p204
      $region14: #{multihead_self_attention.4} parent=5 // pred_check_branch
        %207 = sbr.rel (%p205) target = $region16
      $region15: #{multihead_self_attention.4} parent=5 // pred_region
        // Predicated region
        $region17: #{multihead_self_attention.4} parent=15 // pred_check
          %p208 = pneg %p49
        $region18: #{multihead_self_attention.4} parent=15 // pred_check_branch
          %210 = sbr.rel (%p208) target = $region20
        $region19: #{multihead_self_attention.4} parent=15 // pred_region
          %p211 = scmp.lt.s32.totalorder %s22, 1
          %s212 = scalar_select %p211, %s22, 1
          %p213 = scmp.lt.s32.totalorder %s23, 0
          %s214 = scalar_select %p213, %s23, 0
          %s215 = sadd.s32 %s214, %s212
          %s216 = smul.addr %s215, 8
          %s217 = scalar_lea.vmem %s0, %s216
        $region20: #{multihead_self_attention.4} parent=15 // pred_fallthru
          _
        // Predicated region
        $region21: #{multihead_self_attention.4} parent=15 // pred_check
          %p218 = pneg %p75
        $region22: #{multihead_self_attention.4} parent=15 // pred_check_branch
          %220 = sbr.rel (%p218) target = $region24
        $region23: #{multihead_self_attention.4} parent=15 // pred_region
          %p221 = scmp.lt.s32.totalorder %s22, 1
          %s222 = scalar_select %p221, %s22, 1
          %s223 = smul.addr %s222, 8
          %s224 = scalar_lea.vmem %s1, %s223
        $region24: #{multihead_self_attention.4} parent=15 // pred_fallthru
          _
        // Predicated region
        $region25: #{multihead_self_attention.4} parent=15 // pred_check
          %p225 = pneg %p101
        $region26: #{multihead_self_attention.4} parent=15 // pred_check_branch
          %227 = sbr.rel (%p225) target = $region28
        $region27: #{multihead_self_attention.4} parent=15 // pred_region
          %p228 = scmp.lt.s32.totalorder %s22, 1
          %s229 = scalar_select %p228, %s22, 1
          %s230 = smul.addr %s229, 8
          %s231 = scalar_lea.vmem %s2, %s230
        $region28: #{multihead_self_attention.4} parent=15 // pred_fallthru
          _
        // Predicated region
        $region29: #{multihead_self_attention.4} parent=15 // pred_check
          %p232 = pneg %p127
        $region30: #{multihead_self_attention.4} parent=15 // pred_check_branch
          %234 = sbr.rel (%p232) target = $region32
        $region31: #{multihead_self_attention.4} parent=15 // pred_region
          %p235 = scmp.lt.s32.totalorder %s22, 1
          %s236 = scalar_select %p235, %s22, 1
          %s237 = scalar_lea.vmem %s3, %s236
        $region32: #{multihead_self_attention.4} parent=15 // pred_fallthru
          _
      $region16: #{multihead_self_attention.4} parent=5 // pred_fallthru
        _
      %p238 = scmp.le.s32.totalorder 1, %s15
      %p239 = scmp.lt.s32.totalorder %s15, 3
      %p240 = pnand %p238, %p239
      %p241 = pneg %p240
      // Predicated region
      $region33: #{multihead_self_attention.4} parent=5 // pred_check
        _
      $region34: #{multihead_self_attention.4} parent=5 // pred_check_branch
        %243 = sbr.rel (%p240) target = $region36
      $region35: #{multihead_self_attention.4} parent=5 // pred_region
        %s244 = ssub.s32 %s15, 1
        %p245 = scmp.lt.s32.totalorder %s24, 1
        %s246 = scalar_select %p245, %s24, 1
        %p247 = scmp.lt.s32.totalorder %s25, 0
        %s248 = scalar_select %p247, %s25, 0
        %s249 = sadd.s32 %s248, %s246
        %s250 = smul.addr %s249, 8
        %s251 = scalar_lea.vmem %s0, %s250
        %p252 = pneg %p55
        %p253 = pneg %p52
        %p254 = scmp.lt.s32.totalorder %s24, 1
        %s255 = scalar_select %p254, %s24, 1
        %s256 = smul.addr %s255, 8
        %s257 = scalar_lea.vmem %s1, %s256
        %p258 = pneg %p81
        %p259 = pneg %p78
        %p260 = scmp.lt.s32.totalorder %s24, 1
        %s261 = scalar_select %p260, %s24, 1
        %s262 = smul.addr %s261, 8
        %s263 = scalar_lea.vmem %s2, %s262
        %p264 = pneg %p107
        %p265 = pneg %p104
        %p266 = scmp.lt.s32.totalorder %s24, 1
        %s267 = scalar_select %p266, %s24, 1
        %s268 = scalar_lea.vmem %s3, %s267
        %p269 = pneg %p133
        %p270 = pneg %p130
        %p271 = pneg %p161
        %p272 = pneg %p158
        %p273 = scmp.lt.s32.totalorder %s24, 1
        %s274 = scalar_select %p273, %s24, 1
        %p275 = scmp.lt.s32.totalorder %s25, 0
        %s276 = scalar_select %p275, %s25, 0
        %s277 = sadd.s32 %s276, %s274
        %s278 = smul.addr %s277, 8
        %s279 = scalar_lea.vmem %s4, %s278
        %p280 = pneg %p189
        %p281 = pneg %p186
        %s282 = sand.u32 %s176, 1
        %s283 = scalar_lea.sflag [#allocation3], %s282
        %s284 = sand.u32 %s176, 1
        %s285 = smul.addr %s284, 32
        %s286 = scalar_lea.vmem [#allocation2], %s285
        %p287 = scmp.lt.s32.totalorder %s24, 1
        %s288 = scalar_select %p287, %s24, 1
        %p289 = scmp.lt.s32.totalorder %s25, 0
        %s290 = scalar_select %p289, %s25, 0
        %s291 = sadd.s32 %s290, %s288
        %s292 = smul.addr %s291, 8
        %s293 = scalar_lea.vmem %s0, %s292
        %p294 = scmp.lt.s32.totalorder %s24, 1
        %s295 = scalar_select %p294, %s24, 1
        %s296 = smul.addr %s295, 8
        %s297 = scalar_lea.vmem %s1, %s296
        %p298 = scmp.lt.s32.totalorder %s24, 1
        %s299 = scalar_select %p298, %s24, 1
        %s300 = smul.addr %s299, 8
        %s301 = scalar_lea.vmem %s2, %s300
        %p302 = scmp.lt.s32.totalorder %s24, 1
        %s303 = scalar_select %p302, %s24, 1
        %s304 = scalar_lea.vmem %s3, %s303
        %p305 = scmp.lt.s32.totalorder %s24, 1
        %s306 = scalar_select %p305, %s24, 1
        %p307 = scmp.lt.s32.totalorder %s25, 0
        %s308 = scalar_select %p307, %s25, 0
        %s309 = sadd.s32 %s308, %s306
        %s310 = smul.addr %s309, 8
        %s311 = scalar_lea.vmem %s4, %s310
        %v313 = vld [vmem:[%s293] sm:$0xff]
        %v314 = vpack.c.bf16 %v313, %v313
        %v315 = vld [vmem:[%s297] sm:$0xff]
        %v316 = vpack.c.bf16 %v315, %v315
        %v317 = vld [vmem:[%s301] sm:$0xff]
        %v318 = vpack.c.bf16 %v317, %v317
        %v319 = vld [vmem:[%s304] sm:$0x1]
        %v321 = vlaneseq
        %v322 = vshrl.u32 %v321, 7
        %v323 = vsub.s32 0, %v322
        %v324 = vrot.slane %v319, %v323
        %vm326 = vcmask 64512
        %v328 = vsel %vm326, %v314, 0
        %v331 = vsel %vm326, %v316, 0
        %333 = vmatprep.subr.bf16.mxu0 0
        %334 = vmatpush1.bf16.xpose.msra.mxu0 0
        %335 = vmatprep.subr.bf16.mxu0 0
        %336 = vmatpush1.bf16.xpose.msra.mxu0 0
        %337 = vmatprep.subr.bf16.mxu0 0
        %338 = vmatpush1.bf16.xpose.msra.mxu0 0
        %339 = vmatprep.subr.bf16.mxu0 0
        %340 = vmatpush1.bf16.xpose.msra.mxu0 0
        %341 = vmatprep.subr.bf16.mxu0 0
        %342 = vmatpush1.bf16.xpose.msra.mxu0 0
        %343 = vmatprep.subr.bf16.mxu0 0
        %344 = vmatpush1.bf16.xpose.msra.mxu0 0
        %345 = vmatprep.subr.bf16.mxu0 0
        %346 = vmatpush1.bf16.xpose.msra.mxu0 0
        %347 = vmatprep.subr.bf16.mxu0 0
        %348 = vmatpush1.bf16.xpose.msra.mxu0 %v331
        %349 = vmatprep.subr.bf16.mxu0 0
        %350 = vmatpush2.bf16.xpose.msra.mxu0 0
        %351 = vmatprep.subr.bf16.mxu0 0
        %352 = vmatpush2.bf16.xpose.msra.mxu0 0
        %353 = vmatprep.subr.bf16.mxu0 0
        %354 = vmatpush2.bf16.xpose.msra.mxu0 0
        %355 = vmatprep.subr.bf16.mxu0 0
        %356 = vmatpush2.bf16.xpose.msra.mxu0 0
        %357 = vmatprep.subr.bf16.mxu0 0
        %358 = vmatpush2.bf16.xpose.msra.mxu0 0
        %359 = vmatprep.subr.bf16.mxu0 0
        %360 = vmatpush2.bf16.xpose.msra.mxu0 0
        %361 = vmatprep.subr.bf16.mxu0 0
        %362 = vmatpush2.bf16.xpose.msra.mxu0 0
        %363 = vmatprep.subr.bf16.mxu0 0
        %364 = vmatpush2.bf16.xpose.msra.mxu0 0
        %365 = vmatprep.mubr.bf16.mxu0 0
        %366 = vmatmul.mubr.bf16.gmra.mxu0 %v328
        %v367 = vpop.f32.mrf.mxu0
        %v368 = vadd.f32 %v324, %v367
        %v369 = vpop.f32.mrf.mxu0
        %v370 = vpop.f32.mrf.mxu0
        %v371 = vpop.f32.mrf.mxu0
        %372 = vdwg.mxu0
        %v373 = vmax.f32 %v368, -3.4028235e+38
        %v374 = vsel %vm326, %v373, -inf
        %375 = vmax.xlane.f32.xlu0 %v374
        %v376 = vpop.xlane.xlu0 %375
        %v377 = vsub.f32 %v373, %v376
        %v378 = vmul.f32 %v377, 1.442695
        %v379 = vpow.pop %v378
        %v380 = vsel %vm326, %v379, 0.0
        %381 = vadd.xlane.f32.xlu0 %v380
        %v382 = vpop.xlane.xlu0 %381
        %v383 = vrcp.pop %v382
        %v384 = vmul.f32 %v379, %v383
        %v385 = vpack.c.bf16 %v384, %v384
        %v387 = vsel %vm326, %v385, 0
        %vm389 = vcmask 1043456
        %v391 = vsel %vm389, %v318, 0
        %393 = vmatprep.subr.bf16.mxu0 0
        %394 = vmatpush1.bf16.msra.mxu0 0
        %395 = vmatprep.subr.bf16.mxu0 0
        %396 = vmatpush1.bf16.msra.mxu0 0
        %397 = vmatprep.subr.bf16.mxu0 0
        %398 = vmatpush1.bf16.msra.mxu0 0
        %399 = vmatprep.subr.bf16.mxu0 0
        %400 = vmatpush1.bf16.msra.mxu0 0
        %401 = vmatprep.subr.bf16.mxu0 0
        %402 = vmatpush1.bf16.msra.mxu0 0
        %403 = vmatprep.subr.bf16.mxu0 0
        %404 = vmatpush1.bf16.msra.mxu0 0
        %405 = vmatprep.subr.bf16.mxu0 0
        %406 = vmatpush1.bf16.msra.mxu0 0
        %407 = vmatprep.subr.bf16.mxu0 0
        %408 = vmatpush1.bf16.msra.mxu0 %v391
        %409 = vmatprep.subr.bf16.mxu0 0
        %410 = vmatpush2.bf16.msra.mxu0 0
        %411 = vmatprep.subr.bf16.mxu0 0
        %412 = vmatpush2.bf16.msra.mxu0 0
        %413 = vmatprep.subr.bf16.mxu0 0
        %414 = vmatpush2.bf16.msra.mxu0 0
        %415 = vmatprep.subr.bf16.mxu0 0
        %416 = vmatpush2.bf16.msra.mxu0 0
        %417 = vmatprep.subr.bf16.mxu0 0
        %418 = vmatpush2.bf16.msra.mxu0 0
        %419 = vmatprep.subr.bf16.mxu0 0
        %420 = vmatpush2.bf16.msra.mxu0 0
        %421 = vmatprep.subr.bf16.mxu0 0
        %422 = vmatpush2.bf16.msra.mxu0 0
        %423 = vmatprep.subr.bf16.mxu0 0
        %424 = vmatpush2.bf16.msra.mxu0 0
        %425 = vmatprep.mubr.bf16.mxu0 0
        %426 = vmatmul.mubr.bf16.gmra.mxu0 %v387
        %v427 = vpop.f32.mrf.mxu0
        %v428 = vadd.f32 0.0, %v427
        %v429 = vpop.f32.mrf.mxu0
        %v430 = vpop.f32.mrf.mxu0
        %v431 = vpop.f32.mrf.mxu0
        %432 = vdwg.mxu0
        %433 = vst.msk [vmem:[%s286] sm:$0xff] %vm326, %v384
        %435 = vrot.lane.b32.xlu0 %v314, 120
        %v436 = vpop.permute.xlu0 %435
        %438 = vrot.lane.b32.xlu0 %v316, 120
        %v439 = vpop.permute.xlu0 %438
        %v441 = vsel %vm326, %v436, 0
        %v444 = vsel %vm326, %v439, 0
        %446 = vmatprep.subr.bf16.mxu0 0
        %447 = vmatpush1.bf16.xpose.msra.mxu0 0
        %448 = vmatprep.subr.bf16.mxu0 0
        %449 = vmatpush1.bf16.xpose.msra.mxu0 0
        %450 = vmatprep.subr.bf16.mxu0 0
        %451 = vmatpush1.bf16.xpose.msra.mxu0 0
        %452 = vmatprep.subr.bf16.mxu0 0
        %453 = vmatpush1.bf16.xpose.msra.mxu0 0
        %454 = vmatprep.subr.bf16.mxu0 0
        %455 = vmatpush1.bf16.xpose.msra.mxu0 0
        %456 = vmatprep.subr.bf16.mxu0 0
        %457 = vmatpush1.bf16.xpose.msra.mxu0 0
        %458 = vmatprep.subr.bf16.mxu0 0
        %459 = vmatpush1.bf16.xpose.msra.mxu0 0
        %460 = vmatprep.subr.bf16.mxu0 0
        %461 = vmatpush1.bf16.xpose.msra.mxu0 %v444
        %462 = vmatprep.subr.bf16.mxu0 0
        %463 = vmatpush2.bf16.xpose.msra.mxu0 0
        %464 = vmatprep.subr.bf16.mxu0 0
        %465 = vmatpush2.bf16.xpose.msra.mxu0 0
        %466 = vmatprep.subr.bf16.mxu0 0
        %467 = vmatpush2.bf16.xpose.msra.mxu0 0
        %468 = vmatprep.subr.bf16.mxu0 0
        %469 = vmatpush2.bf16.xpose.msra.mxu0 0
        %470 = vmatprep.subr.bf16.mxu0 0
        %471 = vmatpush2.bf16.xpose.msra.mxu0 0
        %472 = vmatprep.subr.bf16.mxu0 0
        %473 = vmatpush2.bf16.xpose.msra.mxu0 0
        %474 = vmatprep.subr.bf16.mxu0 0
        %475 = vmatpush2.bf16.xpose.msra.mxu0 0
        %476 = vmatprep.subr.bf16.mxu0 0
        %477 = vmatpush2.bf16.xpose.msra.mxu0 0
        %478 = vmatprep.mubr.bf16.mxu0 0
        %479 = vmatmul.mubr.bf16.gmra.mxu0 %v441
        %v480 = vpop.f32.mrf.mxu0
        %v481 = vadd.f32 %v324, %v480
        %v482 = vpop.f32.mrf.mxu0
        %v483 = vpop.f32.mrf.mxu0
        %v484 = vpop.f32.mrf.mxu0
        %485 = vdwg.mxu0
        %v486 = vmax.f32 %v481, -3.4028235e+38
        %v487 = vsel %vm326, %v486, -inf
        %488 = vmax.xlane.f32.xlu0 %v487
        %v489 = vpop.xlane.xlu0 %488
        %v490 = vsub.f32 %v486, %v489
        %v491 = vmul.f32 %v490, 1.442695
        %v492 = vpow.pop %v491
        %v493 = vsel %vm326, %v492, 0.0
        %494 = vadd.xlane.f32.xlu0 %v493
        %v495 = vpop.xlane.xlu0 %494
        %v496 = vrcp.pop %v495
        %v497 = vmul.f32 %v492, %v496
        %v498 = vpack.c.bf16 %v497, %v497
        %500 = vrot.lane.b32.xlu0 %v318, 120
        %v501 = vpop.permute.xlu0 %500
        %v503 = vsel %vm326, %v498, 0
        %v506 = vsel %vm389, %v501, 0
        %508 = vmatprep.subr.bf16.mxu0 0
        %509 = vmatpush1.bf16.msra.mxu0 0
        %510 = vmatprep.subr.bf16.mxu0 0
        %511 = vmatpush1.bf16.msra.mxu0 0
        %512 = vmatprep.subr.bf16.mxu0 0
        %513 = vmatpush1.bf16.msra.mxu0 0
        %514 = vmatprep.subr.bf16.mxu0 0
        %515 = vmatpush1.bf16.msra.mxu0 0
        %516 = vmatprep.subr.bf16.mxu0 0
        %517 = vmatpush1.bf16.msra.mxu0 0
        %518 = vmatprep.subr.bf16.mxu0 0
        %519 = vmatpush1.bf16.msra.mxu0 0
        %520 = vmatprep.subr.bf16.mxu0 0
        %521 = vmatpush1.bf16.msra.mxu0 0
        %522 = vmatprep.subr.bf16.mxu0 0
        %523 = vmatpush1.bf16.msra.mxu0 %v506
        %524 = vmatprep.subr.bf16.mxu0 0
        %525 = vmatpush2.bf16.msra.mxu0 0
        %526 = vmatprep.subr.bf16.mxu0 0
        %527 = vmatpush2.bf16.msra.mxu0 0
        %528 = vmatprep.subr.bf16.mxu0 0
        %529 = vmatpush2.bf16.msra.mxu0 0
        %530 = vmatprep.subr.bf16.mxu0 0
        %531 = vmatpush2.bf16.msra.mxu0 0
        %532 = vmatprep.subr.bf16.mxu0 0
        %533 = vmatpush2.bf16.msra.mxu0 0
        %534 = vmatprep.subr.bf16.mxu0 0
        %535 = vmatpush2.bf16.msra.mxu0 0
        %536 = vmatprep.subr.bf16.mxu0 0
        %537 = vmatpush2.bf16.msra.mxu0 0
        %538 = vmatprep.subr.bf16.mxu0 0
        %539 = vmatpush2.bf16.msra.mxu0 0
        %540 = vmatprep.mubr.bf16.mxu0 0
        %541 = vmatmul.mubr.bf16.gmra.mxu0 %v503
        %v542 = vpop.f32.mrf.mxu0
        %v543 = vadd.f32 0.0, %v542
        %v544 = vpop.f32.mrf.mxu0
        %v545 = vpop.f32.mrf.mxu0
        %v546 = vpop.f32.mrf.mxu0
        %547 = vdwg.mxu0
        %s548 = scalar_lea.vmem %s286, 8 [#allocation2]
        %549 = vst.msk [vmem:[%s548] sm:$0xff] %vm326, %v497
        %550 = vrot.lane.b32.xlu0 %v314, 112
        %v551 = vpop.permute.xlu0 %550
        %552 = vrot.lane.b32.xlu0 %v316, 112
        %v553 = vpop.permute.xlu0 %552
        %v555 = vsel %vm326, %v551, 0
        %v558 = vsel %vm326, %v553, 0
        %560 = vmatprep.subr.bf16.mxu0 0
        %561 = vmatpush1.bf16.xpose.msra.mxu0 0
        %562 = vmatprep.subr.bf16.mxu0 0
        %563 = vmatpush1.bf16.xpose.msra.mxu0 0
        %564 = vmatprep.subr.bf16.mxu0 0
        %565 = vmatpush1.bf16.xpose.msra.mxu0 0
        %566 = vmatprep.subr.bf16.mxu0 0
        %567 = vmatpush1.bf16.xpose.msra.mxu0 0
        %568 = vmatprep.subr.bf16.mxu0 0
        %569 = vmatpush1.bf16.xpose.msra.mxu0 0
        %570 = vmatprep.subr.bf16.mxu0 0
        %571 = vmatpush1.bf16.xpose.msra.mxu0 0
        %572 = vmatprep.subr.bf16.mxu0 0
        %573 = vmatpush1.bf16.xpose.msra.mxu0 0
        %574 = vmatprep.subr.bf16.mxu0 0
        %575 = vmatpush1.bf16.xpose.msra.mxu0 %v558
        %576 = vmatprep.subr.bf16.mxu0 0
        %577 = vmatpush2.bf16.xpose.msra.mxu0 0
        %578 = vmatprep.subr.bf16.mxu0 0
        %579 = vmatpush2.bf16.xpose.msra.mxu0 0
        %580 = vmatprep.subr.bf16.mxu0 0
        %581 = vmatpush2.bf16.xpose.msra.mxu0 0
        %582 = vmatprep.subr.bf16.mxu0 0
        %583 = vmatpush2.bf16.xpose.msra.mxu0 0
        %584 = vmatprep.subr.bf16.mxu0 0
        %585 = vmatpush2.bf16.xpose.msra.mxu0 0
        %586 = vmatprep.subr.bf16.mxu0 0
        %587 = vmatpush2.bf16.xpose.msra.mxu0 0
        %588 = vmatprep.subr.bf16.mxu0 0
        %589 = vmatpush2.bf16.xpose.msra.mxu0 0
        %590 = vmatprep.subr.bf16.mxu0 0
        %591 = vmatpush2.bf16.xpose.msra.mxu0 0
        %592 = vmatprep.mubr.bf16.mxu0 0
        %593 = vmatmul.mubr.bf16.gmra.mxu0 %v555
        %v594 = vpop.f32.mrf.mxu0
        %v595 = vadd.f32 %v324, %v594
        %v596 = vpop.f32.mrf.mxu0
        %v597 = vpop.f32.mrf.mxu0
        %v598 = vpop.f32.mrf.mxu0
        %599 = vdwg.mxu0
        %v600 = vmax.f32 %v595, -3.4028235e+38
        %v601 = vsel %vm326, %v600, -inf
        %602 = vmax.xlane.f32.xlu0 %v601
        %v603 = vpop.xlane.xlu0 %602
        %v604 = vsub.f32 %v600, %v603
        %v605 = vmul.f32 %v604, 1.442695
        %v606 = vpow.pop %v605
        %v607 = vsel %vm326, %v606, 0.0
        %608 = vadd.xlane.f32.xlu0 %v607
        %v609 = vpop.xlane.xlu0 %608
        %v610 = vrcp.pop %v609
        %v611 = vmul.f32 %v606, %v610
        %v612 = vpack.c.bf16 %v611, %v611
        %613 = vrot.lane.b32.xlu0 %v318, 112
        %v614 = vpop.permute.xlu0 %613
        %v616 = vsel %vm326, %v612, 0
        %v619 = vsel %vm389, %v614, 0
        %621 = vmatprep.subr.bf16.mxu0 0
        %622 = vmatpush1.bf16.msra.mxu0 0
        %623 = vmatprep.subr.bf16.mxu0 0
        %624 = vmatpush1.bf16.msra.mxu0 0
        %625 = vmatprep.subr.bf16.mxu0 0
        %626 = vmatpush1.bf16.msra.mxu0 0
        %627 = vmatprep.subr.bf16.mxu0 0
        %628 = vmatpush1.bf16.msra.mxu0 0
        %629 = vmatprep.subr.bf16.mxu0 0
        %630 = vmatpush1.bf16.msra.mxu0 0
        %631 = vmatprep.subr.bf16.mxu0 0
        %632 = vmatpush1.bf16.msra.mxu0 0
        %633 = vmatprep.subr.bf16.mxu0 0
        %634 = vmatpush1.bf16.msra.mxu0 0
        %635 = vmatprep.subr.bf16.mxu0 0
        %636 = vmatpush1.bf16.msra.mxu0 %v619
        %637 = vmatprep.subr.bf16.mxu0 0
        %638 = vmatpush2.bf16.msra.mxu0 0
        %639 = vmatprep.subr.bf16.mxu0 0
        %640 = vmatpush2.bf16.msra.mxu0 0
        %641 = vmatprep.subr.bf16.mxu0 0
        %642 = vmatpush2.bf16.msra.mxu0 0
        %643 = vmatprep.subr.bf16.mxu0 0
        %644 = vmatpush2.bf16.msra.mxu0 0
        %645 = vmatprep.subr.bf16.mxu0 0
        %646 = vmatpush2.bf16.msra.mxu0 0
        %647 = vmatprep.subr.bf16.mxu0 0
        %648 = vmatpush2.bf16.msra.mxu0 0
        %649 = vmatprep.subr.bf16.mxu0 0
        %650 = vmatpush2.bf16.msra.mxu0 0
        %651 = vmatprep.subr.bf16.mxu0 0
        %652 = vmatpush2.bf16.msra.mxu0 0
        %653 = vmatprep.mubr.bf16.mxu0 0
        %654 = vmatmul.mubr.bf16.gmra.mxu0 %v616
        %v655 = vpop.f32.mrf.mxu0
        %v656 = vadd.f32 0.0, %v655
        %v657 = vpop.f32.mrf.mxu0
        %v658 = vpop.f32.mrf.mxu0
        %v659 = vpop.f32.mrf.mxu0
        %660 = vdwg.mxu0
        %s661 = scalar_lea.vmem %s286, 16 [#allocation2]
        %662 = vst.msk [vmem:[%s661] sm:$0xff] %vm326, %v611
        %663 = vrot.lane.b32.xlu0 %v314, 104
        %v664 = vpop.permute.xlu0 %663
        %665 = vrot.lane.b32.xlu0 %v316, 104
        %v666 = vpop.permute.xlu0 %665
        %v668 = vsel %vm326, %v664, 0
        %v671 = vsel %vm326, %v666, 0
        %673 = vmatprep.subr.bf16.mxu0 0
        %674 = vmatpush1.bf16.xpose.msra.mxu0 0
        %675 = vmatprep.subr.bf16.mxu0 0
        %676 = vmatpush1.bf16.xpose.msra.mxu0 0
        %677 = vmatprep.subr.bf16.mxu0 0
        %678 = vmatpush1.bf16.xpose.msra.mxu0 0
        %679 = vmatprep.subr.bf16.mxu0 0
        %680 = vmatpush1.bf16.xpose.msra.mxu0 0
        %681 = vmatprep.subr.bf16.mxu0 0
        %682 = vmatpush1.bf16.xpose.msra.mxu0 0
        %683 = vmatprep.subr.bf16.mxu0 0
        %684 = vmatpush1.bf16.xpose.msra.mxu0 0
        %685 = vmatprep.subr.bf16.mxu0 0
        %686 = vmatpush1.bf16.xpose.msra.mxu0 0
        %687 = vmatprep.subr.bf16.mxu0 0
        %688 = vmatpush1.bf16.xpose.msra.mxu0 %v671
        %689 = vmatprep.subr.bf16.mxu0 0
        %690 = vmatpush2.bf16.xpose.msra.mxu0 0
        %691 = vmatprep.subr.bf16.mxu0 0
        %692 = vmatpush2.bf16.xpose.msra.mxu0 0
        %693 = vmatprep.subr.bf16.mxu0 0
        %694 = vmatpush2.bf16.xpose.msra.mxu0 0
        %695 = vmatprep.subr.bf16.mxu0 0
        %696 = vmatpush2.bf16.xpose.msra.mxu0 0
        %697 = vmatprep.subr.bf16.mxu0 0
        %698 = vmatpush2.bf16.xpose.msra.mxu0 0
        %699 = vmatprep.subr.bf16.mxu0 0
        %700 = vmatpush2.bf16.xpose.msra.mxu0 0
        %701 = vmatprep.subr.bf16.mxu0 0
        %702 = vmatpush2.bf16.xpose.msra.mxu0 0
        %703 = vmatprep.subr.bf16.mxu0 0
        %704 = vmatpush2.bf16.xpose.msra.mxu0 0
        %705 = vmatprep.mubr.bf16.mxu0 0
        %706 = vmatmul.mubr.bf16.gmra.mxu0 %v668
        %v707 = vpop.f32.mrf.mxu0
        %v708 = vadd.f32 %v324, %v707
        %v709 = vpop.f32.mrf.mxu0
        %v710 = vpop.f32.mrf.mxu0
        %v711 = vpop.f32.mrf.mxu0
        %712 = vdwg.mxu0
        %v713 = vmax.f32 %v708, -3.4028235e+38
        %v714 = vsel %vm326, %v713, -inf
        %715 = vmax.xlane.f32.xlu0 %v714
        %v716 = vpop.xlane.xlu0 %715
        %v717 = vsub.f32 %v713, %v716
        %v718 = vmul.f32 %v717, 1.442695
        %v719 = vpow.pop %v718
        %v720 = vsel %vm326, %v719, 0.0
        %721 = vadd.xlane.f32.xlu0 %v720
        %v722 = vpop.xlane.xlu0 %721
        %v723 = vrcp.pop %v722
        %v724 = vmul.f32 %v719, %v723
        %v725 = vpack.c.bf16 %v724, %v724
        %726 = vrot.lane.b32.xlu0 %v318, 104
        %v727 = vpop.permute.xlu0 %726
        %v729 = vsel %vm326, %v725, 0
        %v732 = vsel %vm389, %v727, 0
        %734 = vmatprep.subr.bf16.mxu0 0
        %735 = vmatpush1.bf16.msra.mxu0 0
        %736 = vmatprep.subr.bf16.mxu0 0
        %737 = vmatpush1.bf16.msra.mxu0 0
        %738 = vmatprep.subr.bf16.mxu0 0
        %739 = vmatpush1.bf16.msra.mxu0 0
        %740 = vmatprep.subr.bf16.mxu0 0
        %741 = vmatpush1.bf16.msra.mxu0 0
        %742 = vmatprep.subr.bf16.mxu0 0
        %743 = vmatpush1.bf16.msra.mxu0 0
        %744 = vmatprep.subr.bf16.mxu0 0
        %745 = vmatpush1.bf16.msra.mxu0 0
        %746 = vmatprep.subr.bf16.mxu0 0
        %747 = vmatpush1.bf16.msra.mxu0 0
        %748 = vmatprep.subr.bf16.mxu0 0
        %749 = vmatpush1.bf16.msra.mxu0 %v732
        %750 = vmatprep.subr.bf16.mxu0 0
        %751 = vmatpush2.bf16.msra.mxu0 0
        %752 = vmatprep.subr.bf16.mxu0 0
        %753 = vmatpush2.bf16.msra.mxu0 0
        %754 = vmatprep.subr.bf16.mxu0 0
        %755 = vmatpush2.bf16.msra.mxu0 0
        %756 = vmatprep.subr.bf16.mxu0 0
        %757 = vmatpush2.bf16.msra.mxu0 0
        %758 = vmatprep.subr.bf16.mxu0 0
        %759 = vmatpush2.bf16.msra.mxu0 0
        %760 = vmatprep.subr.bf16.mxu0 0
        %761 = vmatpush2.bf16.msra.mxu0 0
        %762 = vmatprep.subr.bf16.mxu0 0
        %763 = vmatpush2.bf16.msra.mxu0 0
        %764 = vmatprep.subr.bf16.mxu0 0
        %765 = vmatpush2.bf16.msra.mxu0 0
        %766 = vmatprep.mubr.bf16.mxu0 0
        %767 = vmatmul.mubr.bf16.gmra.mxu0 %v729
        %v768 = vpop.f32.mrf.mxu0
        %v769 = vadd.f32 0.0, %v768
        %v770 = vpop.f32.mrf.mxu0
        %v771 = vpop.f32.mrf.mxu0
        %v772 = vpop.f32.mrf.mxu0
        %773 = vdwg.mxu0
        %s774 = scalar_lea.vmem %s286, 24 [#allocation2]
        %775 = vst.msk [vmem:[%s774] sm:$0xff] %vm326, %v724
        %777 = vrot.lane.b32.xlu0 %v543, 8
        %v778 = vpop.permute.xlu0 %777
        %781 = vrot.lane.b32.xlu0 %v656, 16
        %v782 = vpop.permute.xlu0 %781
        %785 = vrot.lane.b32.xlu0 %v769, 24
        %v786 = vpop.permute.xlu0 %785
        %v788 = vsel %vm326, %v428, %v778
        %vm789 = vcmask 130048
        %v790 = vsel %vm789, %v788, %v782
        %vm791 = vcmask 195584
        %v792 = vsel %vm791, %v790, %v786
        %vm793 = vcmask 261120
        %794 = vst.msk [vmem:[%s311] sm:$0xff] %vm793, %v792
        %p795 = scmp.lt.s32.totalorder %s24, 1
        %s796 = scalar_select %p795, %s24, 1
        %p797 = scmp.lt.s32.totalorder %s25, 0
        %s798 = scalar_select %p797, %s25, 0
        %s799 = sadd.s32 %s798, %s796
        %s800 = smul.addr %s799, 8
        %s801 = scalar_lea.vmem %s4, %s800
        %s802 = sand.u32 %s176, 1
        %s803 = scalar_lea.sflag [#allocation3], %s802
        %s804 = sand.u32 %s176, 1
        %s805 = smul.addr %s804, 32
        %s806 = scalar_lea.vmem [#allocation2], %s805
        // Predicated region
        $region37: #{multihead_self_attention.4} parent=35 // pred_check
          %p807 = pneg %p158
        $region38: #{multihead_self_attention.4} parent=35 // pred_check_branch
          %809 = sbr.rel (%p807) target = $region40
        $region39: #{multihead_self_attention.4} parent=35 // pred_region
          _
        $region40: #{multihead_self_attention.4} parent=35 // pred_fallthru
          _
        // Predicated region
        $region41: #{multihead_self_attention.4} parent=35 // pred_check
          %p810 = pneg %p186
        $region42: #{multihead_self_attention.4} parent=35 // pred_check_branch
          %812 = sbr.rel (%p810) target = $region44
        $region43: #{multihead_self_attention.4} parent=35 // pred_region
          %s814 = ssub.s32 512, 512
          %815 = vsyncadd %s803, %s814
          %s816 = smul.addr %s24, 4
          %s817 = sadd.s32 %s25, %s816
          %s818 = smul.addr %s817, 128
          %s819 = scalar_lea.hbm %s5, %s818
          %s820 = sshll.u32 %s806, 4
          %s821 = int_to_ptr.vmem [resolvable:$true] %s820
          %826 = dma.vmem_to_hbm [thread:$0]  %s821, 512, %s819, %s803, 128, 128, 8
        $region44: #{multihead_self_attention.4} parent=35 // pred_fallthru
          _
      $region36: #{multihead_self_attention.4} parent=5 // pred_fallthru
        _
      %p827 = scmp.le.s32.totalorder 2, %s15
      // Predicated region
      $region45: #{multihead_self_attention.4} parent=5 // pred_check
        %p828 = pneg %p827
      $region46: #{multihead_self_attention.4} parent=5 // pred_check_branch
        %830 = sbr.rel (%p828) target = $region48
      $region47: #{multihead_self_attention.4} parent=5 // pred_region
        %s831 = ssub.s32 %s15, 2
        // Predicated region
        $region49: #{multihead_self_attention.4} parent=47 // pred_check
          %p832 = pneg %p164
        $region50: #{multihead_self_attention.4} parent=47 // pred_check_branch
          %834 = sbr.rel (%p832) target = $region52
        $region51: #{multihead_self_attention.4} parent=47 // pred_region
          %p835 = scmp.lt.s32.totalorder %s26, 1
          %s836 = scalar_select %p835, %s26, 1
          %p837 = scmp.lt.s32.totalorder %s27, 0
          %s838 = scalar_select %p837, %s27, 0
          %s839 = sadd.s32 %s838, %s836
          %s840 = smul.addr %s839, 8
          %s841 = scalar_lea.vmem %s4, %s840
        $region52: #{multihead_self_attention.4} parent=47 // pred_fallthru
          _
        // Predicated region
        $region53: #{multihead_self_attention.4} parent=47 // pred_check
          %p842 = pneg %p192
        $region54: #{multihead_self_attention.4} parent=47 // pred_check_branch
          %844 = sbr.rel (%p842) target = $region56
        $region55: #{multihead_self_attention.4} parent=47 // pred_region
          %s845 = sand.u32 %s177, 1
          %s846 = scalar_lea.sflag [#allocation3], %s845
          %s847 = sand.u32 %s177, 1
          %s848 = smul.addr %s847, 32
          %s849 = scalar_lea.vmem [#allocation2], %s848
          %850 = dma.done %s846, 512
        $region56: #{multihead_self_attention.4} parent=47 // pred_fallthru
          _
      $region48: #{multihead_self_attention.4} parent=5 // pred_fallthru
        _
    $region6: #{multihead_self_attention.4} parent=1 // loop_footer
      %s19 = sadd.s32 1, %s15
    $region7: #{multihead_self_attention.4} parent=1 // loop_footer_branch
      %14 = sbr.rel target = $region3
    $region8: #{multihead_self_attention.4} parent=1 // loop_exit
      _
    %851 = vsyncpa [#allocation3], 1
    %s852 = scalar_lea.sflag [#allocation3], 1
    %853 = vsyncpa %s852, 1

</llo_original>
